<compile_context>
chip_gen: v7x
topology: tpu7x:2x2x1
jax: 0.10.0
libtpu: 0.0.40
codegen_flags: <defaults>
</compile_context>

<pallas_src>
import functools

import jax
import jax.numpy as jnp
from jax import lax
from jax.experimental import pallas as pl
from jax.experimental.pallas import tpu as pltpu


# ----------------------------------------------------------------------------
# helpers
# ----------------------------------------------------------------------------
def _pick_row_tile(n, max_tile):
    """Largest row tile <= max_tile that divides n and is a multiple of 8, else n (full)."""
    if n <= max_tile:
        return n
    for t in range(max_tile, 7, -8):
        if n % t == 0:
            return t
    return n


# ----------------------------------------------------------------------------
# Kernel 1: linear projection  y = x @ W^T + b   (W in PyTorch (Dout, Din) layout, bf16)
# ----------------------------------------------------------------------------
def _linear_kernel(x_ref, w_ref, b_ref, o_ref):
    y = lax.dot_general(
        x_ref[...].astype(jnp.bfloat16), w_ref[...],
        dimension_numbers=(((1,), (1,)), ((), ())),   # contract Din with Din (no W^T)
        preferred_element_type=jnp.float32,
    )
    o_ref[...] = (y + b_ref[...]).astype(o_ref.dtype)


def pallas_linear(x2d, w_bf16, b):
    N, Din = x2d.shape
    Dout = w_bf16.shape[0]
    tm = _pick_row_tile(N, 512)
    return pl.pallas_call(
        _linear_kernel,
        out_shape=jax.ShapeDtypeStruct((N, Dout), jnp.float32),
        grid=(N // tm,),
        in_specs=[
            pl.BlockSpec((tm, Din), lambda i: (i, 0)),
            pl.BlockSpec((Dout, Din), lambda i: (0, 0)),
            pl.BlockSpec((1, Dout), lambda i: (0, 0)),
        ],
        out_specs=pl.BlockSpec((tm, Dout), lambda i: (i, 0)),
        compiler_params=pltpu.CompilerParams(dimension_semantics=("parallel",)),
    )(x2d, w_bf16, b.reshape(1, Dout))


# ----------------------------------------------------------------------------
# Kernel 2: per-(batch, q-tile) multi-head attention, heads packed along lanes.
#   inputs : q (tq, H*dk), k (Lk, H*dk), v (Lk, H*dv)     — no head transposes in HBM
#   outputs: concat head output (tq, H*dv)  and  sum-over-heads attention (tq, Lk)
# ----------------------------------------------------------------------------
def _attn_kernel(q_ref, k_ref, v_ref, o_ref, asum_ref, *, n_head, d_k, d_v, scale):
    q = (q_ref[...] * scale).astype(jnp.bfloat16)   # fold 1/temperature into the small q tile
    k = k_ref[...].astype(jnp.bfloat16)
    v = v_ref[...].astype(jnp.bfloat16)

    attn_sum = None
    outs = []
    for h in range(n_head):                          # static unroll over heads
        qh = q[:, h * d_k:(h + 1) * d_k]
        kh = k[:, h * d_k:(h + 1) * d_k]
        vh = v[:, h * d_v:(h + 1) * d_v]
        # s = q_h @ k_h^T via dk-dk contraction (no K transpose through the XLU)
        s = lax.dot_general(qh, kh,
                            dimension_numbers=(((1,), (1,)), ((), ())),
                            preferred_element_type=jnp.float32)
        s = s - jnp.max(s, axis=-1, keepdims=True)
        e = jnp.exp(s)
        p = e * pl.reciprocal(jnp.sum(e, axis=-1, keepdims=True), approx=True)
        # TODO(synk): attention dropout omitted (eval-mode identity).
        attn_sum = p if attn_sum is None else attn_sum + p
        outs.append(jnp.dot(p.astype(jnp.bfloat16), vh,
                            preferred_element_type=jnp.float32))

    # single lane-dense store covering all heads
    o_ref[...] = jnp.concatenate(outs, axis=-1).astype(o_ref.dtype)
    asum_ref[...] = attn_sum.astype(asum_ref.dtype)


def pallas_attention(qp, kp, vp, n_head, d_k, d_v, temperature):
    B, Lq, _ = qp.shape
    Lk = kp.shape[1]
    tq = _pick_row_tile(Lq, 256)
    kernel = functools.partial(_attn_kernel, n_head=n_head, d_k=d_k, d_v=d_v,
                               scale=1.0 / float(temperature))
    return pl.pallas_call(
        kernel,
        out_shape=(
            jax.ShapeDtypeStruct((B, Lq, n_head * d_v), jnp.float32),
            jax.ShapeDtypeStruct((B, Lq, Lk), jnp.float32),
        ),
        grid=(B, Lq // tq),                          # both axes parallel (megacore-friendly)
        in_specs=[
            pl.BlockSpec((None, tq, n_head * d_k), lambda b, i: (b, i, 0)),
            pl.BlockSpec((None, Lk, n_head * d_k), lambda b, i: (b, 0, 0)),
            pl.BlockSpec((None, Lk, n_head * d_v), lambda b, i: (b, 0, 0)),
        ],
        out_specs=(
            pl.BlockSpec((None, tq, n_head * d_v), lambda b, i: (b, i, 0)),
            pl.BlockSpec((None, tq, Lk), lambda b, i: (b, i, 0)),
        ),
        compiler_params=pltpu.CompilerParams(
            dimension_semantics=("parallel", "parallel")),
    )(qp, kp, vp)


# ----------------------------------------------------------------------------
# Kernel 3: fc projection + LayerNorm(eps) + residual (dropout = identity, eval)
# ----------------------------------------------------------------------------
def _out_ln_kernel(x_ref, w_ref, b_ref, g_ref, beta_ref, res_ref, o_ref, *, eps):
    y = lax.dot_general(
        x_ref[...].astype(jnp.bfloat16), w_ref[...],
        dimension_numbers=(((1,), (1,)), ((), ())),
        preferred_element_type=jnp.float32,
    ) + b_ref[...]
    # TODO(synk): nn.Dropout omitted (eval-mode identity).
    mu = jnp.mean(y, axis=-1, keepdims=True)
    var = jnp.mean((y - mu) ** 2, axis=-1, keepdims=True)
    yn = (y - mu) * lax.rsqrt(var + eps)
    o_ref[...] = (yn * g_ref[...] + beta_ref[...] + res_ref[...]).astype(o_ref.dtype)


def pallas_out_proj_ln(x2d, w_bf16, b, gamma, beta, res2d, eps=1e-6):
    N, Hin = x2d.shape
    D = w_bf16.shape[0]
    tm = _pick_row_tile(N, 512)
    kernel = functools.partial(_out_ln_kernel, eps=eps)
    return pl.pallas_call(
        kernel,
        out_shape=jax.ShapeDtypeStruct((N, D), jnp.float32),
        grid=(N // tm,),
        in_specs=[
            pl.BlockSpec((tm, Hin), lambda i: (i, 0)),
            pl.BlockSpec((D, Hin), lambda i: (0, 0)),
            pl.BlockSpec((1, D), lambda i: (0, 0)),
            pl.BlockSpec((1, D), lambda i: (0, 0)),
            pl.BlockSpec((1, D), lambda i: (0, 0)),
            pl.BlockSpec((tm, D), lambda i: (i, 0)),
        ],
        out_specs=pl.BlockSpec((tm, D), lambda i: (i, 0)),
        compiler_params=pltpu.CompilerParams(dimension_semantics=("parallel",)),
    )(x2d, w_bf16, b.reshape(1, D), gamma.reshape(1, D), beta.reshape(1, D), res2d)


# ----------------------------------------------------------------------------
# Full MultiHeadAttention forward (conv_size=1, mask=None, return_cache=False)
# ----------------------------------------------------------------------------
def mha_forward(q, k, v, params, n_head, d_k, d_v):
    B, Lq, D = q.shape
    Lk = k.shape[1]
    Lv = v.shape[1]
    residual = q

    # Cast weights to bf16 once (halves weight DMA; MXU runs at bf16 peak). Biases stay f32.
    wq = params["wq"].astype(jnp.bfloat16)
    wk = params["wk"].astype(jnp.bfloat16)
    wv = params["wv"].astype(jnp.bfloat16)
    w_fc = params["w_fc"].astype(jnp.bfloat16)

    # Projections stay in (B, L, H*d) layout -> no HBM head-layout transposes.
    qp = pallas_linear(q.reshape(B * Lq, D), wq, params["bq"]).reshape(B, Lq, n_head * d_k)
    kp = pallas_linear(k.reshape(B * Lk, D), wk, params["bk"]).reshape(B, Lk, n_head * d_k)
    vp = pallas_linear(v.reshape(B * Lv, D), wv, params["bv"]).reshape(B, Lv, n_head * d_v)

    temperature = float(d_k) ** 0.5
    head_out, attn_sum = pallas_attention(qp, kp, vp, n_head, d_k, d_v, temperature)

    out2d = pallas_out_proj_ln(
        head_out.reshape(B * Lq, n_head * d_v),
        w_fc, params["b_fc"], params["gamma"], params["beta"],
        residual.reshape(B * Lq, D), eps=1e-6,
    )
    return out2d.reshape(B, Lq, D), attn_sum


# ----------------------------------------------------------------------------
# Pure-JAX f32 reference (for correctness check only)
# ----------------------------------------------------------------------------
def ref_forward(q, k, v, p, n_head, d_k, d_v):
    B, Lq, D = q.shape
    Lk = k.shape[1]
    qp = (q.reshape(-1, D) @ p["wq"].T + p["bq"]).reshape(B, Lq, n_head, d_k)
    kp = (k.reshape(-1, D) @ p["wk"].T + p["bk"]).reshape(B, Lk, n_head, d_k)
    vp = (v.reshape(-1, D) @ p["wv"].T + p["bv"]).reshape(B, Lk, n_head, d_v)
    qh = jnp.transpose(qp, (2, 0, 1, 3))
    kh = jnp.transpose(kp, (2, 0, 1, 3))
    vh = jnp.transpose(vp, (2, 0, 1, 3))
    s = jnp.einsum("hbqd,hbkd->hbqk", qh, kh) / (float(d_k) ** 0.5)
    attn = jax.nn.softmax(s, axis=-1)
    o = jnp.einsum("hbqk,hbkd->hbqd", attn, vh)
    attn_sum = attn.sum(0)
    concat = jnp.transpose(o, (1, 2, 0, 3)).reshape(B, Lq, n_head * d_v)
    y = concat @ p["w_fc"].T + p["b_fc"]
    mu = y.mean(-1, keepdims=True)
    var = ((y - mu) ** 2).mean(-1, keepdims=True)
    yn = (y - mu) / jnp.sqrt(var + 1e-6)
    out = yn * p["gamma"] + p["beta"] + q
    return out, attn_sum


if __name__ == "__main__":
    B, L, d_model = 2, 8, 32
    n_head, d_k, d_v, conv_size = 4, 8, 8, 1  # conv_size=1 -> Linear projections

    key = jax.random.PRNGKey(0)
    ks = jax.random.split(key, 12)
    f32 = jnp.float32

    params = {
        "wq": 0.1 * jax.random.normal(ks[0], (n_head * d_k, d_model), f32),
        "bq": 0.1 * jax.random.normal(ks[1], (n_head * d_k,), f32),
        "wk": 0.1 * jax.random.normal(ks[2], (n_head * d_k, d_model), f32),
        "bk": 0.1 * jax.random.normal(ks[3], (n_head * d_k,), f32),
        "wv": 0.1 * jax.random.normal(ks[4], (n_head * d_v, d_model), f32),
        "bv": 0.1 * jax.random.normal(ks[5], (n_head * d_v,), f32),
        "w_fc": 0.1 * jax.random.normal(ks[6], (d_model, n_head * d_v), f32),
        "b_fc": 0.1 * jax.random.normal(ks[7], (d_model,), f32),
        "gamma": jnp.ones((d_model,), f32),
        "beta": jnp.zeros((d_model,), f32),
    }

    q = jax.random.normal(ks[8], (B, L, d_model), f32)
    k = jax.random.normal(ks[9], (B, L, d_model), f32)
    v = jax.random.normal(ks[10], (B, L, d_model), f32)

    fwd = jax.jit(functools.partial(mha_forward, n_head=n_head, d_k=d_k, d_v=d_v))
    out, attn = fwd(q, k, v, params)
    out, attn = jax.block_until_ready((out, attn))

    ref_out, ref_attn = ref_forward(q, k, v, params, n_head, d_k, d_v)
    assert out.shape == (B, L, d_model) and attn.shape == (B, L, L)
    # bf16 MXU operands + approx reciprocal => looser tolerance vs the f32 reference.
    assert jnp.allclose(attn, ref_attn, atol=2e-2, rtol=2e-2)
    assert jnp.allclose(out, ref_out, atol=5e-2, rtol=5e-2)

    print("KERNEL_OK")
</pallas_src>

<mosaic_0001>
module attributes {stable_mosaic.version = 11 : i64} {
  func.func @_out_ln_kernel(%arg0: i32, %arg1: memref<16x32xf32, #tpu.memory_space<vmem>>, %arg2: memref<32x32xbf16, #tpu.memory_space<vmem>>, %arg3: memref<1x32xf32, #tpu.memory_space<vmem>>, %arg4: memref<1x32xf32, #tpu.memory_space<vmem>>, %arg5: memref<1x32xf32, #tpu.memory_space<vmem>>, %arg6: memref<16x32xf32, #tpu.memory_space<vmem>>, %arg7: memref<16x32xf32, #tpu.memory_space<vmem>>) attributes {dimension_semantics = [#tpu.dimension_semantics<parallel>], iteration_bounds = array<i64: 1>, scalar_prefetch = 0 : i64, scratch_operands = 0 : i64, tpu.core_type = #tpu.core_type<tc>, window_params = [{transform_indices = @transform_0, window_bounds = array<i64: 16, 32>}, {pipeline_mode = #tpu.pipeline_mode<synchronous>, transform_indices = @transform_1, window_bounds = array<i64: 32, 32>}, {pipeline_mode = #tpu.pipeline_mode<synchronous>, transform_indices = @transform_2, window_bounds = array<i64: 1, 32>}, {pipeline_mode = #tpu.pipeline_mode<synchronous>, transform_indices = @transform_3, window_bounds = array<i64: 1, 32>}, {pipeline_mode = #tpu.pipeline_mode<synchronous>, transform_indices = @transform_4, window_bounds = array<i64: 1, 32>}, {transform_indices = @transform_5, window_bounds = array<i64: 16, 32>}, {transform_indices = @transform_6, window_bounds = array<i64: 16, 32>}]} {
    %c0 = arith.constant 0 : index
    %c0_0 = arith.constant 0 : index
    %0 = vector.load %arg1[%c0, %c0_0] : memref<16x32xf32, #tpu.memory_space<vmem>>, vector<16x32xf32>
    %1 = arith.truncf %0 : vector<16x32xf32> to vector<16x32xbf16>
    %c0_1 = arith.constant 0 : index
    %c0_2 = arith.constant 0 : index
    %2 = vector.load %arg2[%c0_1, %c0_2] : memref<32x32xbf16, #tpu.memory_space<vmem>>, vector<32x32xbf16>
    %cst = arith.constant dense<0.000000e+00> : vector<16x32xf32>
    %3 = tpu.matmul %1, %2, %cst {dimension_numbers = #tpu.dot_dimension_numbers<[1], [1], [0], [0], [0, 0, 1, 0], [], []>} : vector<16x32xbf16>, vector<32x32xbf16>, vector<16x32xf32> -> vector<16x32xf32>
    %c0_3 = arith.constant 0 : index
    %c0_4 = arith.constant 0 : index
    %4 = vector.load %arg3[%c0_3, %c0_4] : memref<1x32xf32, #tpu.memory_space<vmem>>, vector<1x32xf32>
    %5 = vector.broadcast %4 : vector<1x32xf32> to vector<16x32xf32>
    %6 = arith.addf %3, %5 : vector<16x32xf32>
    %cst_5 = arith.constant dense<0.000000e+00> : vector<16xf32>
    %7 = vector.multi_reduction <add>, %6, %cst_5 [1] : vector<16x32xf32> to vector<16xf32>
    %8 = vector.shape_cast %7 : vector<16xf32> to vector<16x1xf32>
    %cst_6 = arith.constant 3.200000e+01 : f32
    %9 = vector.broadcast %cst_6 : f32 to vector<16x1xf32>
    %10 = arith.divf %8, %9 : vector<16x1xf32>
    %11 = vector.broadcast %10 : vector<16x1xf32> to vector<16x32xf32>
    %12 = arith.subf %6, %11 : vector<16x32xf32>
    %13 = arith.mulf %12, %12 : vector<16x32xf32>
    %cst_7 = arith.constant dense<0.000000e+00> : vector<16xf32>
    %14 = vector.multi_reduction <add>, %13, %cst_7 [1] : vector<16x32xf32> to vector<16xf32>
    %15 = vector.shape_cast %14 : vector<16xf32> to vector<16x1xf32>
    %cst_8 = arith.constant 3.200000e+01 : f32
    %16 = vector.broadcast %cst_8 : f32 to vector<16x1xf32>
    %17 = arith.divf %15, %16 : vector<16x1xf32>
    %18 = vector.broadcast %10 : vector<16x1xf32> to vector<16x32xf32>
    %19 = arith.subf %6, %18 : vector<16x32xf32>
    %cst_9 = arith.constant 9.99999997E-7 : f32
    %20 = vector.broadcast %cst_9 : f32 to vector<16x1xf32>
    %21 = arith.addf %17, %20 : vector<16x1xf32>
    %22 = math.rsqrt %21 : vector<16x1xf32>
    %23 = vector.broadcast %22 : vector<16x1xf32> to vector<16x32xf32>
    %24 = arith.mulf %19, %23 : vector<16x32xf32>
    %c0_10 = arith.constant 0 : index
    %c0_11 = arith.constant 0 : index
    %25 = vector.load %arg4[%c0_10, %c0_11] : memref<1x32xf32, #tpu.memory_space<vmem>>, vector<1x32xf32>
    %26 = vector.broadcast %25 : vector<1x32xf32> to vector<16x32xf32>
    %27 = arith.mulf %24, %26 : vector<16x32xf32>
    %c0_12 = arith.constant 0 : index
    %c0_13 = arith.constant 0 : index
    %28 = vector.load %arg5[%c0_12, %c0_13] : memref<1x32xf32, #tpu.memory_space<vmem>>, vector<1x32xf32>
    %29 = vector.broadcast %28 : vector<1x32xf32> to vector<16x32xf32>
    %30 = arith.addf %27, %29 : vector<16x32xf32>
    %c0_14 = arith.constant 0 : index
    %c0_15 = arith.constant 0 : index
    %31 = vector.load %arg6[%c0_14, %c0_15] : memref<16x32xf32, #tpu.memory_space<vmem>>, vector<16x32xf32>
    %32 = arith.addf %30, %31 : vector<16x32xf32>
    %c0_16 = arith.constant 0 : index
    %c0_17 = arith.constant 0 : index
    %33 = vector.load %arg7[%c0_16, %c0_17] : memref<16x32xf32, #tpu.memory_space<vmem>>, vector<16x32xf32>
    tpu.vector_store %arg7[%c0_16, %c0_17], %32 {strides = array<i32>} : memref<16x32xf32, #tpu.memory_space<vmem>>, vector<16x32xf32>,
    return
  }
  func.func @transform_0(%arg0: i32) -> (i32, i32) {
    %c0_i32 = arith.constant 0 : i32
    %c0_i32_0 = arith.constant 0 : i32
    return %arg0, %c0_i32 : i32, i32
  }
  func.func @transform_1(%arg0: i32) -> (i32, i32) {
    %c0_i32 = arith.constant 0 : i32
    %c0_i32_0 = arith.constant 0 : i32
    %c0_i32_1 = arith.constant 0 : i32
    return %c0_i32, %c0_i32_0 : i32, i32
  }
  func.func @transform_2(%arg0: i32) -> (i32, i32) {
    %c0_i32 = arith.constant 0 : i32
    %c0_i32_0 = arith.constant 0 : i32
    %c0_i32_1 = arith.constant 0 : i32
    return %c0_i32, %c0_i32_0 : i32, i32
  }
  func.func @transform_3(%arg0: i32) -> (i32, i32) {
    %c0_i32 = arith.constant 0 : i32
    %c0_i32_0 = arith.constant 0 : i32
    %c0_i32_1 = arith.constant 0 : i32
    return %c0_i32, %c0_i32_0 : i32, i32
  }
  func.func @transform_4(%arg0: i32) -> (i32, i32) {
    %c0_i32 = arith.constant 0 : i32
    %c0_i32_0 = arith.constant 0 : i32
    %c0_i32_1 = arith.constant 0 : i32
    return %c0_i32, %c0_i32_0 : i32, i32
  }
  func.func @transform_5(%arg0: i32) -> (i32, i32) {
    %c0_i32 = arith.constant 0 : i32
    %c0_i32_0 = arith.constant 0 : i32
    return %arg0, %c0_i32 : i32, i32
  }
  func.func @transform_6(%arg0: i32) -> (i32, i32) {
    %c0_i32 = arith.constant 0 : i32
    %c0_i32_0 = arith.constant 0 : i32
    return %arg0, %c0_i32 : i32, i32
  }
}

module attributes {stable_mosaic.version = 11 : i64} {
  func.func @_linear_kernel(%arg0: i32, %arg1: memref<16x32xf32, #tpu.memory_space<vmem>>, %arg2: memref<32x32xbf16, #tpu.memory_space<vmem>>, %arg3: memref<1x32xf32, #tpu.memory_space<vmem>>, %arg4: memref<16x32xf32, #tpu.memory_space<vmem>>) attributes {dimension_semantics = [#tpu.dimension_semantics<parallel>], iteration_bounds = array<i64: 1>, scalar_prefetch = 0 : i64, scratch_operands = 0 : i64, tpu.core_type = #tpu.core_type<tc>, window_params = [{transform_indices = @transform_0, window_bounds = array<i64: 16, 32>}, {pipeline_mode = #tpu.pipeline_mode<synchronous>, transform_indices = @transform_1, window_bounds = array<i64: 32, 32>}, {pipeline_mode = #tpu.pipeline_mode<synchronous>, transform_indices = @transform_2, window_bounds = array<i64: 1, 32>}, {transform_indices = @transform_3, window_bounds = array<i64: 16, 32>}]} {
    %c0 = arith.constant 0 : index
    %c0_0 = arith.constant 0 : index
    %0 = vector.load %arg1[%c0, %c0_0] : memref<16x32xf32, #tpu.memory_space<vmem>>, vector<16x32xf32>
    %1 = arith.truncf %0 : vector<16x32xf32> to vector<16x32xbf16>
    %c0_1 = arith.constant 0 : index
    %c0_2 = arith.constant 0 : index
    %2 = vector.load %arg2[%c0_1, %c0_2] : memref<32x32xbf16, #tpu.memory_space<vmem>>, vector<32x32xbf16>
    %cst = arith.constant dense<0.000000e+00> : vector<16x32xf32>
    %3 = tpu.matmul %1, %2, %cst {dimension_numbers = #tpu.dot_dimension_numbers<[1], [1], [0], [0], [0, 0, 1, 0], [], []>} : vector<16x32xbf16>, vector<32x32xbf16>, vector<16x32xf32> -> vector<16x32xf32>
    %c0_3 = arith.constant 0 : index
    %c0_4 = arith.constant 0 : index
    %4 = vector.load %arg3[%c0_3, %c0_4] : memref<1x32xf32, #tpu.memory_space<vmem>>, vector<1x32xf32>
    %5 = vector.broadcast %4 : vector<1x32xf32> to vector<16x32xf32>
    %6 = arith.addf %3, %5 : vector<16x32xf32>
    %c0_5 = arith.constant 0 : index
    %c0_6 = arith.constant 0 : index
    %7 = vector.load %arg4[%c0_5, %c0_6] : memref<16x32xf32, #tpu.memory_space<vmem>>, vector<16x32xf32>
    tpu.vector_store %arg4[%c0_5, %c0_6], %6 {strides = array<i32>} : memref<16x32xf32, #tpu.memory_space<vmem>>, vector<16x32xf32>,
    return
  }
  func.func @transform_0(%arg0: i32) -> (i32, i32) {
    %c0_i32 = arith.constant 0 : i32
    %c0_i32_0 = arith.constant 0 : i32
    return %arg0, %c0_i32 : i32, i32
  }
  func.func @transform_1(%arg0: i32) -> (i32, i32) {
    %c0_i32 = arith.constant 0 : i32
    %c0_i32_0 = arith.constant 0 : i32
    %c0_i32_1 = arith.constant 0 : i32
    return %c0_i32, %c0_i32_0 : i32, i32
  }
  func.func @transform_2(%arg0: i32) -> (i32, i32) {
    %c0_i32 = arith.constant 0 : i32
    %c0_i32_0 = arith.constant 0 : i32
    %c0_i32_1 = arith.constant 0 : i32
    return %c0_i32, %c0_i32_0 : i32, i32
  }
  func.func @transform_3(%arg0: i32) -> (i32, i32) {
    %c0_i32 = arith.constant 0 : i32
    %c0_i32_0 = arith.constant 0 : i32
    return %arg0, %c0_i32 : i32, i32
  }
}

module attributes {stable_mosaic.version = 11 : i64} {
  func.func @_attn_kernel(%arg0: i32, %arg1: i32, %arg2: memref<1x8x32xf32, #tpu.memory_space<vmem>>, %arg3: memref<1x8x32xf32, #tpu.memory_space<vmem>>, %arg4: memref<1x8x32xf32, #tpu.memory_space<vmem>>, %arg5: memref<1x8x32xf32, #tpu.memory_space<vmem>>, %arg6: memref<1x8x8xf32, #tpu.memory_space<vmem>>) attributes {dimension_semantics = [#tpu.dimension_semantics<parallel>, #tpu.dimension_semantics<parallel>], iteration_bounds = array<i64: 2, 1>, scalar_prefetch = 0 : i64, scratch_operands = 0 : i64, tpu.core_type = #tpu.core_type<tc>, window_params = [{transform_indices = @transform_0, window_bounds = array<i64: 1, 8, 32>}, {transform_indices = @transform_1, window_bounds = array<i64: 1, 8, 32>}, {transform_indices = @transform_2, window_bounds = array<i64: 1, 8, 32>}, {transform_indices = @transform_3, window_bounds = array<i64: 1, 8, 32>}, {transform_indices = @transform_4, window_bounds = array<i64: 1, 8, 8>}]} {
    %c0 = arith.constant 0 : index
    %c0_0 = arith.constant 0 : index
    %c0_1 = arith.constant 0 : index
    %0 = vector.load %arg2[%c0, %c0_0, %c0_1] : memref<1x8x32xf32, #tpu.memory_space<vmem>>, vector<1x8x32xf32>
    %1 = vector.shape_cast %0 : vector<1x8x32xf32> to vector<8x32xf32>
    %cst = arith.constant 0.353553385 : f32
    %2 = vector.broadcast %cst : f32 to vector<8x32xf32>
    %3 = arith.mulf %1, %2 : vector<8x32xf32>
    %4 = arith.truncf %3 : vector<8x32xf32> to vector<8x32xbf16>
    %c0_2 = arith.constant 0 : index
    %c0_3 = arith.constant 0 : index
    %c0_4 = arith.constant 0 : index
    %5 = vector.load %arg3[%c0_2, %c0_3, %c0_4] : memref<1x8x32xf32, #tpu.memory_space<vmem>>, vector<1x8x32xf32>
    %6 = vector.shape_cast %5 : vector<1x8x32xf32> to vector<8x32xf32>
    %7 = arith.truncf %6 : vector<8x32xf32> to vector<8x32xbf16>
    %c0_5 = arith.constant 0 : index
    %c0_6 = arith.constant 0 : index
    %c0_7 = arith.constant 0 : index
    %8 = vector.load %arg4[%c0_5, %c0_6, %c0_7] : memref<1x8x32xf32, #tpu.memory_space<vmem>>, vector<1x8x32xf32>
    %9 = vector.shape_cast %8 : vector<1x8x32xf32> to vector<8x32xf32>
    %10 = arith.truncf %9 : vector<8x32xf32> to vector<8x32xbf16>
    %11 = vector.extract_strided_slice %4 {offsets = [0, 0], sizes = [8, 8], strides = [1, 1]} : vector<8x32xbf16> to vector<8x8xbf16>
    %12 = vector.extract_strided_slice %7 {offsets = [0, 0], sizes = [8, 8], strides = [1, 1]} : vector<8x32xbf16> to vector<8x8xbf16>
    %13 = vector.extract_strided_slice %10 {offsets = [0, 0], sizes = [8, 8], strides = [1, 1]} : vector<8x32xbf16> to vector<8x8xbf16>
    %cst_8 = arith.constant dense<0.000000e+00> : vector<8x8xf32>
    %14 = tpu.matmul %11, %12, %cst_8 {dimension_numbers = #tpu.dot_dimension_numbers<[1], [1], [0], [0], [0, 0, 1, 0], [], []>} : vector<8x8xbf16>, vector<8x8xbf16>, vector<8x8xf32> -> vector<8x8xf32>
    %cst_9 = arith.constant dense<0xFF800000> : vector<8xf32>
    %15 = vector.multi_reduction <maximumf>, %14, %cst_9 [1] : vector<8x8xf32> to vector<8xf32>
    %16 = vector.shape_cast %15 : vector<8xf32> to vector<8x1xf32>
    %17 = vector.broadcast %16 : vector<8x1xf32> to vector<8x8xf32>
    %18 = arith.subf %14, %17 : vector<8x8xf32>
    %19 = math.exp %18 : vector<8x8xf32>
    %cst_10 = arith.constant dense<0.000000e+00> : vector<8xf32>
    %20 = vector.multi_reduction <add>, %19, %cst_10 [1] : vector<8x8xf32> to vector<8xf32>
    %21 = vector.shape_cast %20 : vector<8xf32> to vector<8x1xf32>
    %22 = tpu.reciprocal %21 {approx = true} : vector<8x1xf32> -> vector<8x1xf32>
    %23 = vector.broadcast %22 : vector<8x1xf32> to vector<8x8xf32>
    %24 = arith.mulf %19, %23 : vector<8x8xf32>
    %25 = arith.truncf %24 : vector<8x8xf32> to vector<8x8xbf16>
    %cst_11 = arith.constant dense<0.000000e+00> : vector<8x8xf32>
    %26 = tpu.matmul %25, %13, %cst_11 {dimension_numbers = #tpu.dot_dimension_numbers<[1], [0], [0], [1], [0, 0, 1, 1], [], []>} : vector<8x8xbf16>, vector<8x8xbf16>, vector<8x8xf32> -> vector<8x8xf32>
    %27 = vector.extract_strided_slice %4 {offsets = [0, 8], sizes = [8, 8], strides = [1, 1]} : vector<8x32xbf16> to vector<8x8xbf16>
    %28 = vector.extract_strided_slice %7 {offsets = [0, 8], sizes = [8, 8], strides = [1, 1]} : vector<8x32xbf16> to vector<8x8xbf16>
    %29 = vector.extract_strided_slice %10 {offsets = [0, 8], sizes = [8, 8], strides = [1, 1]} : vector<8x32xbf16> to vector<8x8xbf16>
    %cst_12 = arith.constant dense<0.000000e+00> : vector<8x8xf32>
    %30 = tpu.matmul %27, %28, %cst_12 {dimension_numbers = #tpu.dot_dimension_numbers<[1], [1], [0], [0], [0, 0, 1, 0], [], []>} : vector<8x8xbf16>, vector<8x8xbf16>, vector<8x8xf32> -> vector<8x8xf32>
    %cst_13 = arith.constant dense<0xFF800000> : vector<8xf32>
    %31 = vector.multi_reduction <maximumf>, %30, %cst_13 [1] : vector<8x8xf32> to vector<8xf32>
    %32 = vector.shape_cast %31 : vector<8xf32> to vector<8x1xf32>
    %33 = vector.broadcast %32 : vector<8x1xf32> to vector<8x8xf32>
    %34 = arith.subf %30, %33 : vector<8x8xf32>
    %35 = math.exp %34 : vector<8x8xf32>
    %cst_14 = arith.constant dense<0.000000e+00> : vector<8xf32>
    %36 = vector.multi_reduction <add>, %35, %cst_14 [1] : vector<8x8xf32> to vector<8xf32>
    %37 = vector.shape_cast %36 : vector<8xf32> to vector<8x1xf32>
    %38 = tpu.reciprocal %37 {approx = true} : vector<8x1xf32> -> vector<8x1xf32>
    %39 = vector.broadcast %38 : vector<8x1xf32> to vector<8x8xf32>
    %40 = arith.mulf %35, %39 : vector<8x8xf32>
    %41 = arith.addf %24, %40 : vector<8x8xf32>
    %42 = arith.truncf %40 : vector<8x8xf32> to vector<8x8xbf16>
    %cst_15 = arith.constant dense<0.000000e+00> : vector<8x8xf32>
    %43 = tpu.matmul %42, %29, %cst_15 {dimension_numbers = #tpu.dot_dimension_numbers<[1], [0], [0], [1], [0, 0, 1, 1], [], []>} : vector<8x8xbf16>, vector<8x8xbf16>, vector<8x8xf32> -> vector<8x8xf32>
    %44 = vector.extract_strided_slice %4 {offsets = [0, 16], sizes = [8, 8], strides = [1, 1]} : vector<8x32xbf16> to vector<8x8xbf16>
    %45 = vector.extract_strided_slice %7 {offsets = [0, 16], sizes = [8, 8], strides = [1, 1]} : vector<8x32xbf16> to vector<8x8xbf16>
    %46 = vector.extract_strided_slice %10 {offsets = [0, 16], sizes = [8, 8], strides = [1, 1]} : vector<8x32xbf16> to vector<8x8xbf16>
    %cst_16 = arith.constant dense<0.000000e+00> : vector<8x8xf32>
    %47 = tpu.matmul %44, %45, %cst_16 {dimension_numbers = #tpu.dot_dimension_numbers<[1], [1], [0], [0], [0, 0, 1, 0], [], []>} : vector<8x8xbf16>, vector<8x8xbf16>, vector<8x8xf32> -> vector<8x8xf32>
    %cst_17 = arith.constant dense<0xFF800000> : vector<8xf32>
    %48 = vector.multi_reduction <maximumf>, %47, %cst_17 [1] : vector<8x8xf32> to vector<8xf32>
    %49 = vector.shape_cast %48 : vector<8xf32> to vector<8x1xf32>
    %50 = vector.broadcast %49 : vector<8x1xf32> to vector<8x8xf32>
    %51 = arith.subf %47, %50 : vector<8x8xf32>
    %52 = math.exp %51 : vector<8x8xf32>
    %cst_18 = arith.constant dense<0.000000e+00> : vector<8xf32>
    %53 = vector.multi_reduction <add>, %52, %cst_18 [1] : vector<8x8xf32> to vector<8xf32>
    %54 = vector.shape_cast %53 : vector<8xf32> to vector<8x1xf32>
    %55 = tpu.reciprocal %54 {approx = true} : vector<8x1xf32> -> vector<8x1xf32>
    %56 = vector.broadcast %55 : vector<8x1xf32> to vector<8x8xf32>
    %57 = arith.mulf %52, %56 : vector<8x8xf32>
    %58 = arith.addf %41, %57 : vector<8x8xf32>
    %59 = arith.truncf %57 : vector<8x8xf32> to vector<8x8xbf16>
    %cst_19 = arith.constant dense<0.000000e+00> : vector<8x8xf32>
    %60 = tpu.matmul %59, %46, %cst_19 {dimension_numbers = #tpu.dot_dimension_numbers<[1], [0], [0], [1], [0, 0, 1, 1], [], []>} : vector<8x8xbf16>, vector<8x8xbf16>, vector<8x8xf32> -> vector<8x8xf32>
    %61 = vector.extract_strided_slice %4 {offsets = [0, 24], sizes = [8, 8], strides = [1, 1]} : vector<8x32xbf16> to vector<8x8xbf16>
    %62 = vector.extract_strided_slice %7 {offsets = [0, 24], sizes = [8, 8], strides = [1, 1]} : vector<8x32xbf16> to vector<8x8xbf16>
    %63 = vector.extract_strided_slice %10 {offsets = [0, 24], sizes = [8, 8], strides = [1, 1]} : vector<8x32xbf16> to vector<8x8xbf16>
    %cst_20 = arith.constant dense<0.000000e+00> : vector<8x8xf32>
    %64 = tpu.matmul %61, %62, %cst_20 {dimension_numbers = #tpu.dot_dimension_numbers<[1], [1], [0], [0], [0, 0, 1, 0], [], []>} : vector<8x8xbf16>, vector<8x8xbf16>, vector<8x8xf32> -> vector<8x8xf32>
    %cst_21 = arith.constant dense<0xFF800000> : vector<8xf32>
    %65 = vector.multi_reduction <maximumf>, %64, %cst_21 [1] : vector<8x8xf32> to vector<8xf32>
    %66 = vector.shape_cast %65 : vector<8xf32> to vector<8x1xf32>
    %67 = vector.broadcast %66 : vector<8x1xf32> to vector<8x8xf32>
    %68 = arith.subf %64, %67 : vector<8x8xf32>
    %69 = math.exp %68 : vector<8x8xf32>
    %cst_22 = arith.constant dense<0.000000e+00> : vector<8xf32>
    %70 = vector.multi_reduction <add>, %69, %cst_22 [1] : vector<8x8xf32> to vector<8xf32>
    %71 = vector.shape_cast %70 : vector<8xf32> to vector<8x1xf32>
    %72 = tpu.reciprocal %71 {approx = true} : vector<8x1xf32> -> vector<8x1xf32>
    %73 = vector.broadcast %72 : vector<8x1xf32> to vector<8x8xf32>
    %74 = arith.mulf %69, %73 : vector<8x8xf32>
    %75 = arith.addf %58, %74 : vector<8x8xf32>
    %76 = arith.truncf %74 : vector<8x8xf32> to vector<8x8xbf16>
    %cst_23 = arith.constant dense<0.000000e+00> : vector<8x8xf32>
    %77 = tpu.matmul %76, %63, %cst_23 {dimension_numbers = #tpu.dot_dimension_numbers<[1], [0], [0], [1], [0, 0, 1, 1], [], []>} : vector<8x8xbf16>, vector<8x8xbf16>, vector<8x8xf32> -> vector<8x8xf32>
    %78 = tpu.concatenate %26, %43, %60, %77 in 1 : vector<8x8xf32>, vector<8x8xf32>, vector<8x8xf32>, vector<8x8xf32> -> vector<8x32xf32>
    %c0_24 = arith.constant 0 : index
    %c0_25 = arith.constant 0 : index
    %c0_26 = arith.constant 0 : index
    %79 = vector.load %arg5[%c0_24, %c0_25, %c0_26] : memref<1x8x32xf32, #tpu.memory_space<vmem>>, vector<1x8x32xf32>
    %80 = vector.shape_cast %79 : vector<1x8x32xf32> to vector<8x32xf32>
    %81 = vector.shape_cast %78 : vector<8x32xf32> to vector<1x8x32xf32>
    tpu.vector_store %arg5[%c0_24, %c0_25, %c0_26], %81 {strides = array<i32>} : memref<1x8x32xf32, #tpu.memory_space<vmem>>, vector<1x8x32xf32>,
    %c0_27 = arith.constant 0 : index
    %c0_28 = arith.constant 0 : index
    %c0_29 = arith.constant 0 : index
    %82 = vector.load %arg6[%c0_27, %c0_28, %c0_29] : memref<1x8x8xf32, #tpu.memory_space<vmem>>, vector<1x8x8xf32>
    %83 = vector.shape_cast %82 : vector<1x8x8xf32> to vector<8x8xf32>
    %84 = vector.shape_cast %75 : vector<8x8xf32> to vector<1x8x8xf32>
    tpu.vector_store %arg6[%c0_27, %c0_28, %c0_29], %84 {strides = array<i32>} : memref<1x8x8xf32, #tpu.memory_space<vmem>>, vector<1x8x8xf32>,
    return
  }
  func.func @transform_0(%arg0: i32, %arg1: i32) -> (i32, i32, i32) {
    %c0_i32 = arith.constant 0 : i32
    %c0_i32_0 = arith.constant 0 : i32
    return %arg0, %arg1, %c0_i32 : i32, i32, i32
  }
  func.func @transform_1(%arg0: i32, %arg1: i32) -> (i32, i32, i32) {
    %c0_i32 = arith.constant 0 : i32
    %c0_i32_0 = arith.constant 0 : i32
    %c0_i32_1 = arith.constant 0 : i32
    return %arg0, %c0_i32, %c0_i32_0 : i32, i32, i32
  }
  func.func @transform_2(%arg0: i32, %arg1: i32) -> (i32, i32, i32) {
    %c0_i32 = arith.constant 0 : i32
    %c0_i32_0 = arith.constant 0 : i32
    %c0_i32_1 = arith.constant 0 : i32
    return %arg0, %c0_i32, %c0_i32_0 : i32, i32, i32
  }
  func.func @transform_3(%arg0: i32, %arg1: i32) -> (i32, i32, i32) {
    %c0_i32 = arith.constant 0 : i32
    %c0_i32_0 = arith.constant 0 : i32
    return %arg0, %arg1, %c0_i32 : i32, i32, i32
  }
  func.func @transform_4(%arg0: i32, %arg1: i32) -> (i32, i32, i32) {
    %c0_i32 = arith.constant 0 : i32
    %c0_i32_0 = arith.constant 0 : i32
    return %arg0, %arg1, %c0_i32 : i32, i32, i32
  }
}

</mosaic_0001>

<llo_original>
// kernel: mha_forward.5
$region0: #{mha_forward.5}
  #allocation0 [shape = 'u32[]', space=smem, size = 0x4, offset = 0x4, fixed_abs, tag = 'smem constant byte address 0x4 - core index']
  #allocation1 [shape = 'u32[144,128]{1,0:T(1,128)}', space=vmem, size = 0x12000, scoped, tag = 'internal scratch']
  %s0 = inlined_call_operand.vmem [shape: f32[16,32], index: 0, kind: input, shape index: {}]
  %s1 = inlined_call_operand.vmem [shape: bf16[32,32], index: 1, kind: input, shape index: {}]
  %s2 = inlined_call_operand.vmem [shape: f32[1,32], index: 2, kind: input, shape index: {}]
  %s3 = inlined_call_operand.vmem [shape: f32[16,32], index: 3, kind: output, shape index: {}]
  %s4 = sld [smem:[#allocation0]]
  $region22: #{mha_forward.5} parent=0
    _
  %s6 = ssub.s32 1, %s4
  %s7 = scalar_select 0, %s6, %s4
  // Predicated region
  $region2: #{mha_forward.5} parent=0 // pred_check
    _
  $region3: #{mha_forward.5} parent=0 // pred_check_branch
    %9 = sbr.rel (0) target = $region5
  $region4: #{mha_forward.5} parent=0 // pred_region
    _
  $region5: #{mha_forward.5} parent=0 // pred_fallthru
    _
  // Predicated region
  $region6: #{mha_forward.5} parent=0 // pred_check
    _
  $region7: #{mha_forward.5} parent=0 // pred_check_branch
    %11 = sbr.rel (0) target = $region9
  $region8: #{mha_forward.5} parent=0 // pred_region
    _
  $region9: #{mha_forward.5} parent=0 // pred_fallthru
    _
  // Predicated region
  $region10: #{mha_forward.5} parent=0 // pred_check
    _
  $region11: #{mha_forward.5} parent=0 // pred_check_branch
    %13 = sbr.rel (0) target = $region13
  $region12: #{mha_forward.5} parent=0 // pred_region
    _
  $region13: #{mha_forward.5} parent=0 // pred_fallthru
    _
  %v15 = vld [vmem:[%s0] sm:$0xff]
  %v16 = vld [vmem:[%s0 + $0x8] sm:$0xff]
  %v17 = vpack.c.bf16 %v16, %v15
  %v18 = vld [vmem:[%s1] sm:$0xf]
  %v19 = vld [vmem:[%s1 + $0x4] sm:$0xf]
  %v20 = vld [vmem:[%s1 + $0x8] sm:$0xf]
  %v21 = vld [vmem:[%s1 + $0xc] sm:$0xf]
  %v22 = vld [vmem:[%s2] sm:$0x1]
  %v24 = vlaneseq
  %v25 = vshrl.u32 %v24, 7
  %v26 = vsub.s32 0, %v25
  %v27 = vrot.slane %v22, %v26
  %v33 = vunpack.c.l.b16 %v18
  %v34 = vunpack.c.l.b16 %v19
  %v35 = vunpack.c.l.b16 %v20
  %v36 = vunpack.c.l.b16 %v21
  %v37 = vpack.c.b16 %v34, %v33
  %v38 = vpack.c.b16 %v36, %v35
  %vm39 = vcmask 261120
  %v41 = vsel %vm39, %v17, 0
  %v44 = vsel %vm39, %v37, 0
  %v47 = vsel %vm39, %v38, 0
  %49 = vmatprep.subr.bf16.mxu0 0
  %50 = vmatpush1.bf16.xpose.msra.mxu0 %v44
  %51 = vmatprep.subr.bf16.mxu0 0
  %52 = vmatpush1.bf16.xpose.msra.mxu0 %v47
  %53 = vmatprep.subr.bf16.mxu0 0
  %54 = vmatpush1.bf16.xpose.msra.mxu0 0
  %55 = vmatprep.subr.bf16.mxu0 0
  %56 = vmatpush1.bf16.xpose.msra.mxu0 0
  %57 = vmatprep.subr.bf16.mxu0 0
  %58 = vmatpush1.bf16.xpose.msra.mxu0 0
  %59 = vmatprep.subr.bf16.mxu0 0
  %60 = vmatpush1.bf16.xpose.msra.mxu0 0
  %61 = vmatprep.subr.bf16.mxu0 0
  %62 = vmatpush1.bf16.xpose.msra.mxu0 0
  %63 = vmatprep.subr.bf16.mxu0 0
  %64 = vmatpush1.bf16.xpose.msra.mxu0 0
  %65 = vmatprep.subr.bf16.mxu0 0
  %66 = vmatpush1.bf16.xpose.msra.mxu0 0
  %67 = vmatprep.subr.bf16.mxu0 0
  %68 = vmatpush1.bf16.xpose.msra.mxu0 0
  %69 = vmatprep.subr.bf16.mxu0 0
  %70 = vmatpush1.bf16.xpose.msra.mxu0 0
  %71 = vmatprep.subr.bf16.mxu0 0
  %72 = vmatpush1.bf16.xpose.msra.mxu0 0
  %73 = vmatprep.subr.bf16.mxu0 0
  %74 = vmatpush1.bf16.xpose.msra.mxu0 0
  %75 = vmatprep.subr.bf16.mxu0 0
  %76 = vmatpush1.bf16.xpose.msra.mxu0 0
  %77 = vmatprep.subr.bf16.mxu0 0
  %78 = vmatpush1.bf16.xpose.msra.mxu0 0
  %79 = vmatprep.subr.bf16.mxu0 0
  %80 = vmatpush1.bf16.xpose.msra.mxu0 0
  %81 = vmatprep.mubr.bf16.mxu0 0
  %82 = vmatmul.mubr.bf16.gmra.mrb[0].mxu0 %v41
  %v83 = vpop.f32.mrb[0].mxu0
  %v84 = vadd.f32 %v27, %v83
  %v85 = vpop.f32.mrb[0].mxu0
  %v86 = vpop.f32.mrb[0].mxu0
  %v87 = vadd.f32 %v27, %v86
  %v88 = vpop.f32.mrb[0].mxu0
  %89 = vdwg.mxu0
  %90 = vst.msk [vmem:[%s3] sm:$0xff] %vm39, %v84
  %91 = vst.msk [vmem:[%s3 + $0x8] sm:$0xff] %vm39, %v87
  // Predicated region
  $region14: #{mha_forward.5} parent=0 // pred_check
    _
  $region15: #{mha_forward.5} parent=0 // pred_check_branch
    %93 = sbr.rel (0) target = $region17
  $region16: #{mha_forward.5} parent=0 // pred_region
    _
  $region17: #{mha_forward.5} parent=0 // pred_fallthru
    _
  // Predicated region
  $region18: #{mha_forward.5} parent=0 // pred_check
    _
  $region19: #{mha_forward.5} parent=0 // pred_check_branch
    %95 = sbr.rel (0) target = $region21
  $region20: #{mha_forward.5} parent=0 // pred_region
    _
  $region21: #{mha_forward.5} parent=0 // pred_fallthru
    _

// kernel: mha_forward.9
$region0: #{mha_forward.9}
  #allocation0 [shape = 'u32[]', space=smem, size = 0x4, offset = 0x4, fixed_abs, tag = 'smem constant byte address 0x4 - core index']
  #allocation1 [shape = 'u32[144,128]{1,0:T(1,128)}', space=vmem, size = 0x12000, scoped, tag = 'internal scratch']
  %s0 = inlined_call_operand.vmem [shape: f32[16,32], index: 0, kind: input, shape index: {}]
  %s1 = inlined_call_operand.vmem [shape: bf16[32,32], index: 1, kind: input, shape index: {}]
  %s2 = inlined_call_operand.vmem [shape: f32[1,32], index: 2, kind: input, shape index: {}]
  %s3 = inlined_call_operand.vmem [shape: f32[1,32], index: 3, kind: input, shape index: {}]
  %s4 = inlined_call_operand.vmem [shape: f32[1,32], index: 4, kind: input, shape index: {}]
  %s5 = inlined_call_operand.vmem [shape: f32[16,32], index: 5, kind: input, shape index: {}]
  %s6 = inlined_call_operand.hbm [shape: f32[16,32], index: 6, kind: output, shape index: {}]
  %s7 = sld [smem:[#allocation0]]
  $region34: #{mha_forward.9} parent=0
    _
  %s9 = ssub.s32 1, %s7
  %s10 = scalar_select 0, %s9, %s7
  $region1: #{mha_forward.9} parent=0
    #allocation2 [shape = 'u8[8192]{0}', space=vmem, size = 0x2000, scoped, tag = 'output window, operand 0, single buffered']
    #allocation3 [shape = 's32[1]{0}', space=sflag, size = 0x4, scoped, tag = 'scoped memory for mha_forward.9']
    %11 = vsyncpa [#allocation3], 0
    // Predicated region
    $region2: #{mha_forward.9} parent=1 // pred_check
      _
    $region3: #{mha_forward.9} parent=1 // pred_check_branch
      %13 = sbr.rel (0) target = $region5
    $region4: #{mha_forward.9} parent=1 // pred_region
      _
    $region5: #{mha_forward.9} parent=1 // pred_fallthru
      _
    // Predicated region
    $region6: #{mha_forward.9} parent=1 // pred_check
      _
    $region7: #{mha_forward.9} parent=1 // pred_check_branch
      %15 = sbr.rel (0) target = $region9
    $region8: #{mha_forward.9} parent=1 // pred_region
      _
    $region9: #{mha_forward.9} parent=1 // pred_fallthru
      _
    // Predicated region
    $region10: #{mha_forward.9} parent=1 // pred_check
      _
    $region11: #{mha_forward.9} parent=1 // pred_check_branch
      %17 = sbr.rel (0) target = $region13
    $region12: #{mha_forward.9} parent=1 // pred_region
      _
    $region13: #{mha_forward.9} parent=1 // pred_fallthru
      _
    // Predicated region
    $region14: #{mha_forward.9} parent=1 // pred_check
      _
    $region15: #{mha_forward.9} parent=1 // pred_check_branch
      %19 = sbr.rel (0) target = $region17
    $region16: #{mha_forward.9} parent=1 // pred_region
      _
    $region17: #{mha_forward.9} parent=1 // pred_fallthru
      _
    // Predicated region
    $region18: #{mha_forward.9} parent=1 // pred_check
      _
    $region19: #{mha_forward.9} parent=1 // pred_check_branch
      %21 = sbr.rel (0) target = $region21
    $region20: #{mha_forward.9} parent=1 // pred_region
      _
    $region21: #{mha_forward.9} parent=1 // pred_fallthru
      _
    // Predicated region
    $region22: #{mha_forward.9} parent=1 // pred_check
      _
    $region23: #{mha_forward.9} parent=1 // pred_check_branch
      %23 = sbr.rel (0) target = $region25
    $region24: #{mha_forward.9} parent=1 // pred_region
      _
    $region25: #{mha_forward.9} parent=1 // pred_fallthru
      _
    %v25 = vld [vmem:[%s0] sm:$0xff]
    %v26 = vld [vmem:[%s0 + $0x8] sm:$0xff]
    %v27 = vpack.c.bf16 %v26, %v25
    %v28 = vld [vmem:[%s1] sm:$0xf]
    %v29 = vld [vmem:[%s1 + $0x4] sm:$0xf]
    %v30 = vld [vmem:[%s1 + $0x8] sm:$0xf]
    %v31 = vld [vmem:[%s1 + $0xc] sm:$0xf]
    %v32 = vld [vmem:[%s2] sm:$0x1]
    %v34 = vlaneseq
    %v35 = vshrl.u32 %v34, 7
    %v36 = vsub.s32 0, %v35
    %v37 = vrot.slane %v32, %v36
    %v43 = vunpack.c.l.b16 %v28
    %v44 = vunpack.c.l.b16 %v29
    %v45 = vunpack.c.l.b16 %v30
    %v46 = vunpack.c.l.b16 %v31
    %v47 = vpack.c.b16 %v44, %v43
    %v48 = vpack.c.b16 %v46, %v45
    %vm49 = vcmask 261120
    %v51 = vsel %vm49, %v27, 0
    %v54 = vsel %vm49, %v47, 0
    %v57 = vsel %vm49, %v48, 0
    %59 = vmatprep.subr.bf16.mxu0 0
    %60 = vmatpush1.bf16.xpose.msra.mxu0 %v54
    %61 = vmatprep.subr.bf16.mxu0 0
    %62 = vmatpush1.bf16.xpose.msra.mxu0 %v57
    %63 = vmatprep.subr.bf16.mxu0 0
    %64 = vmatpush1.bf16.xpose.msra.mxu0 0
    %65 = vmatprep.subr.bf16.mxu0 0
    %66 = vmatpush1.bf16.xpose.msra.mxu0 0
    %67 = vmatprep.subr.bf16.mxu0 0
    %68 = vmatpush1.bf16.xpose.msra.mxu0 0
    %69 = vmatprep.subr.bf16.mxu0 0
    %70 = vmatpush1.bf16.xpose.msra.mxu0 0
    %71 = vmatprep.subr.bf16.mxu0 0
    %72 = vmatpush1.bf16.xpose.msra.mxu0 0
    %73 = vmatprep.subr.bf16.mxu0 0
    %74 = vmatpush1.bf16.xpose.msra.mxu0 0
    %75 = vmatprep.subr.bf16.mxu0 0
    %76 = vmatpush1.bf16.xpose.msra.mxu0 0
    %77 = vmatprep.subr.bf16.mxu0 0
    %78 = vmatpush1.bf16.xpose.msra.mxu0 0
    %79 = vmatprep.subr.bf16.mxu0 0
    %80 = vmatpush1.bf16.xpose.msra.mxu0 0
    %81 = vmatprep.subr.bf16.mxu0 0
    %82 = vmatpush1.bf16.xpose.msra.mxu0 0
    %83 = vmatprep.subr.bf16.mxu0 0
    %84 = vmatpush1.bf16.xpose.msra.mxu0 0
    %85 = vmatprep.subr.bf16.mxu0 0
    %86 = vmatpush1.bf16.xpose.msra.mxu0 0
    %87 = vmatprep.subr.bf16.mxu0 0
    %88 = vmatpush1.bf16.xpose.msra.mxu0 0
    %89 = vmatprep.subr.bf16.mxu0 0
    %90 = vmatpush1.bf16.xpose.msra.mxu0 0
    %91 = vmatprep.mubr.bf16.mxu0 0
    %92 = vmatmul.mubr.bf16.gmra.mrb[0].mxu0 %v51
    %v93 = vpop.f32.mrb[0].mxu0
    %v94 = vadd.f32 %v37, %v93
    %v95 = vpop.f32.mrb[0].mxu0
    %v96 = vpop.f32.mrb[0].mxu0
    %v97 = vadd.f32 %v37, %v96
    %v98 = vpop.f32.mrb[0].mxu0
    %99 = vdwg.mxu0
    %v100 = vsel %vm49, %v94, 0.0
    %101 = vadd.xlane.f32.xlu0 %v100
    %v102 = vpop.xlane.xlu0 %101
    %v103 = vsel %vm49, %v97, 0.0
    %104 = vadd.xlane.f32.xlu0 %v103
    %v105 = vpop.xlane.xlu0 %104
    %v106 = vrcp.pop 32.0
    %v107 = vmul.f32 %v102, %v106
    %v108 = vmul.f32 %v105, %v106
    %v109 = vsub.f32 %v94, %v107
    %v110 = vsub.f32 %v97, %v108
    %v111 = vmul.f32 %v109, %v109
    %v112 = vmul.f32 %v110, %v110
    %v113 = vsel %vm49, %v111, 0.0
    %114 = vadd.xlane.f32.xlu0 %v113
    %v115 = vpop.xlane.xlu0 %114
    %v116 = vsel %vm49, %v112, 0.0
    %117 = vadd.xlane.f32.xlu0 %v116
    %v118 = vpop.xlane.xlu0 %117
    %v119 = vmul.f32 %v115, %v106
    %v120 = vmul.f32 %v118, %v106
    %v121 = vadd.f32 %v119, 1e-06
    %v122 = vadd.f32 %v120, 1e-06
    %v123 = vrsqrt.pop %v121
    %v124 = vrsqrt.pop %v122
    %v125 = vmul.f32 %v109, %v123
    %v126 = vmul.f32 %v110, %v124
    %v127 = vld [vmem:[%s3] sm:$0x1]
    %v129 = vlaneseq
    %v130 = vshrl.u32 %v129, 7
    %v131 = vsub.s32 0, %v130
    %v132 = vrot.slane %v127, %v131
    %v134 = vmul.f32 %v125, %v132
    %v135 = vmul.f32 %v126, %v132
    %v136 = vld [vmem:[%s4] sm:$0x1]
    %v138 = vlaneseq
    %v139 = vshrl.u32 %v138, 7
    %v140 = vsub.s32 0, %v139
    %v141 = vrot.slane %v136, %v140
    %v143 = vadd.f32 %v134, %v141
    %v144 = vadd.f32 %v135, %v141
    %v145 = vld [vmem:[%s5] sm:$0xff]
    %v146 = vld [vmem:[%s5 + $0x8] sm:$0xff]
    %v147 = vadd.f32 %v143, %v145
    %v148 = vadd.f32 %v144, %v146
    %149 = vst.msk [vmem:[#allocation2] sm:$0xff] %vm49, %v147
    %150 = vst.msk [vmem:[#allocation2 + $0x8] sm:$0xff] %vm49, %v148
    // Predicated region
    $region26: #{mha_forward.9} parent=1 // pred_check
      _
    $region27: #{mha_forward.9} parent=1 // pred_check_branch
      %152 = sbr.rel (0) target = $region29
    $region28: #{mha_forward.9} parent=1 // pred_region
      %s154 = ssub.s32 256, 256
      %155 = vsyncadd [#allocation3], %s154
      %s156 = sshll.u32 [#allocation2], 4
      %s157 = int_to_ptr.vmem [resolvable:$true] %s156
      %162 = dma.vmem_to_hbm [thread:$0]  %s157, 256, %s6, [#allocation3], 128, 128, 8
    $region29: #{mha_forward.9} parent=1 // pred_fallthru
      _
    // Predicated region
    $region30: #{mha_forward.9} parent=1 // pred_check
      _
    $region31: #{mha_forward.9} parent=1 // pred_check_branch
      %164 = sbr.rel (0) target = $region33
    $region32: #{mha_forward.9} parent=1 // pred_region
      %165 = dma.done [#allocation3], 256
    $region33: #{mha_forward.9} parent=1 // pred_fallthru
      _
    %166 = vsyncpa [#allocation3], 1

// kernel: mha_forward.8
$region0: #{mha_forward.8}
  #allocation0 [shape = 'u32[]', space=smem, size = 0x4, offset = 0x4, fixed_abs, tag = 'smem constant byte address 0x4 - core index']
  #allocation1 [shape = 'u32[144,128]{1,0:T(1,128)}', space=vmem, size = 0x12000, scoped, tag = 'internal scratch']
  %s0 = inlined_call_operand.vmem [shape: f32[2,8,32], index: 0, kind: input, shape index: {}]
  %s1 = inlined_call_operand.vmem [shape: f32[2,8,32], index: 1, kind: input, shape index: {}]
  %s2 = inlined_call_operand.vmem [shape: f32[2,8,32], index: 2, kind: input, shape index: {}]
  %s3 = inlined_call_operand.vmem [shape: f32[2,8,32], index: 3, kind: output, shape index: {0}]
  %s4 = inlined_call_operand.hbm [shape: f32[2,8,8], index: 4, kind: output, shape index: {1}]
  %5 = xla_tuple %s3, %s4
  %s6 = sld [smem:[#allocation0]]
  $region53: #{mha_forward.8} parent=0
    _
  %s8 = ssub.s32 1, %s6
  %s9 = scalar_select 0, %s8, %s6
  $region1: #{mha_forward.8} parent=0
    #allocation2 [shape = 'u8[8192]{0}', space=vmem, size = 0x2000, scoped, tag = 'output window, operand 1']
    #allocation3 [shape = 's32[2]{0}', space=sflag, size = 0x8, scoped, tag = 'scoped memory for mha_forward.8']
    %10 = vsyncpa [#allocation3], 0
    %s11 = scalar_lea.sflag [#allocation3], 1
    %12 = vsyncpa %s11, 0
    loop: start=0, step=1, limit=4
    $region2: #{mha_forward.8} parent=1 // loop_pre_header
      _
    $region3: #{mha_forward.8} parent=1 // loop_header
      %s14 = sphi 0, %s18
      %p15 = scmp.ge.s32.totalorder %s14, 4
      %s21 = sphi 0, %s33
      %s22 = sphi 0, %s29
      %s23 = sphi 0, %s21
      %s24 = sphi 0, %s22
      %s25 = sphi 0, %s23
      %s26 = sphi 0, %s24
      %s38 = sphi 0, %s40
      %s41 = sphi 0, %s38
      %s42 = sphi 0, %s41
      %s58 = sphi 0, %s42
      %s64 = sphi 0, %s66
      %s67 = sphi 0, %s64
      %s68 = sphi 0, %s67
      %s84 = sphi 0, %s68
      %s90 = sphi 0, %s92
      %s93 = sphi 0, %s90
      %s94 = sphi 0, %s93
      %s110 = sphi 0, %s94
      %s118 = sphi 0, %s120
      %s121 = sphi 0, %s118
      %s122 = sphi 0, %s121
      %s138 = sphi 0, %s122
      %s146 = sphi 0, %s148
      %s149 = sphi 0, %s146
      %s150 = sphi 0, %s149
      %s166 = sphi 0, %s150
    $region4: #{mha_forward.8} parent=1 // loop_header_branch
      %17 = sbr.rel (%p15) target = $region8
    $region5: #{mha_forward.8} parent=1 // loop_body
      %s19 = ssub.s32 %s14, 1
      %s20 = ssub.s32 %s14, 2
      %s27 = sadd.s32 1, %s22
      %p28 = scmp.ge.s32.totalorder %s27, 1
      %s29 = scalar_select %p28, 0, %s27
      %s30 = sadd.s32 1, %s21
      %s31 = scalar_select %p28, %s30, %s21
      %p32 = scmp.ge.s32.totalorder %s31, 2
      %s33 = scalar_select %p32, 0, %s31
      %s34 = ssub.s32 %s21, %s33
      %s35 = ssub.s32 %s22, %s29
      %s36 = sor.u32 %s34, %s35
      %p37 = scmp.eq.s32.totalorder %s36, 0
      %s39 = sadd.s32 %s38, 1
      %s40 = scalar_select %p37, %s38, %s39
      %p43 = pneg %p37
      %p44 = scmp.eq.s32.totalorder %s14, 1
      %p45 = por %p43, %p44
      %p46 = scmp.ne.s32.totalorder %s38, %s41
      %p47 = scmp.eq.s32.totalorder %s14, 0
      %p48 = por %p46, %p47
      %p49 = scmp.ne.s32.totalorder %s38, %s41
      %p50 = scmp.eq.s32.totalorder %s19, 1
      %p51 = por %p49, %p50
      %p52 = scmp.ne.s32.totalorder %s41, %s42
      %p53 = scmp.eq.s32.totalorder %s19, 0
      %p54 = por %p52, %p53
      %p55 = scmp.ne.s32.totalorder %s41, %s42
      %p56 = scmp.eq.s32.totalorder %s20, 1
      %p57 = por %p55, %p56
      %p59 = scmp.ne.s32.totalorder %s42, %s58
      %p60 = scmp.eq.s32.totalorder %s20, 0
      %p61 = por %p59, %p60
      %s62 = ssub.s32 %s21, %s33
      %p63 = scmp.eq.s32.totalorder %s62, 0
      %s65 = sadd.s32 %s64, 1
      %s66 = scalar_select %p63, %s64, %s65
      %p69 = pneg %p63
      %p70 = scmp.eq.s32.totalorder %s14, 1
      %p71 = por %p69, %p70
      %p72 = scmp.ne.s32.totalorder %s64, %s67
      %p73 = scmp.eq.s32.totalorder %s14, 0
      %p74 = por %p72, %p73
      %p75 = scmp.ne.s32.totalorder %s64, %s67
      %p76 = scmp.eq.s32.totalorder %s19, 1
      %p77 = por %p75, %p76
      %p78 = scmp.ne.s32.totalorder %s67, %s68
      %p79 = scmp.eq.s32.totalorder %s19, 0
      %p80 = por %p78, %p79
      %p81 = scmp.ne.s32.totalorder %s67, %s68
      %p82 = scmp.eq.s32.totalorder %s20, 1
      %p83 = por %p81, %p82
      %p85 = scmp.ne.s32.totalorder %s68, %s84
      %p86 = scmp.eq.s32.totalorder %s20, 0
      %p87 = por %p85, %p86
      %s88 = ssub.s32 %s21, %s33
      %p89 = scmp.eq.s32.totalorder %s88, 0
      %s91 = sadd.s32 %s90, 1
      %s92 = scalar_select %p89, %s90, %s91
      %p95 = pneg %p89
      %p96 = scmp.eq.s32.totalorder %s14, 1
      %p97 = por %p95, %p96
      %p98 = scmp.ne.s32.totalorder %s90, %s93
      %p99 = scmp.eq.s32.totalorder %s14, 0
      %p100 = por %p98, %p99
      %p101 = scmp.ne.s32.totalorder %s90, %s93
      %p102 = scmp.eq.s32.totalorder %s19, 1
      %p103 = por %p101, %p102
      %p104 = scmp.ne.s32.totalorder %s93, %s94
      %p105 = scmp.eq.s32.totalorder %s19, 0
      %p106 = por %p104, %p105
      %p107 = scmp.ne.s32.totalorder %s93, %s94
      %p108 = scmp.eq.s32.totalorder %s20, 1
      %p109 = por %p107, %p108
      %p111 = scmp.ne.s32.totalorder %s94, %s110
      %p112 = scmp.eq.s32.totalorder %s20, 0
      %p113 = por %p111, %p112
      %s114 = ssub.s32 %s21, %s33
      %s115 = ssub.s32 %s22, %s29
      %s116 = sor.u32 %s114, %s115
      %p117 = scmp.eq.s32.totalorder %s116, 0
      %s119 = sadd.s32 %s118, 1
      %s120 = scalar_select %p117, %s118, %s119
      %p123 = pneg %p117
      %p124 = scmp.eq.s32.totalorder %s14, 1
      %p125 = por %p123, %p124
      %p126 = scmp.ne.s32.totalorder %s118, %s121
      %p127 = scmp.eq.s32.totalorder %s14, 0
      %p128 = por %p126, %p127
      %p129 = scmp.ne.s32.totalorder %s118, %s121
      %p130 = scmp.eq.s32.totalorder %s19, 1
      %p131 = por %p129, %p130
      %p132 = scmp.ne.s32.totalorder %s121, %s122
      %p133 = scmp.eq.s32.totalorder %s19, 0
      %p134 = por %p132, %p133
      %p135 = scmp.ne.s32.totalorder %s121, %s122
      %p136 = scmp.eq.s32.totalorder %s20, 1
      %p137 = por %p135, %p136
      %p139 = scmp.ne.s32.totalorder %s122, %s138
      %p140 = scmp.eq.s32.totalorder %s20, 0
      %p141 = por %p139, %p140
      %s142 = ssub.s32 %s21, %s33
      %s143 = ssub.s32 %s22, %s29
      %s144 = sor.u32 %s142, %s143
      %p145 = scmp.eq.s32.totalorder %s144, 0
      %s147 = sadd.s32 %s146, 1
      %s148 = scalar_select %p145, %s146, %s147
      %p151 = pneg %p145
      %p152 = scmp.eq.s32.totalorder %s14, 1
      %p153 = por %p151, %p152
      %p154 = scmp.ne.s32.totalorder %s146, %s149
      %p155 = scmp.eq.s32.totalorder %s14, 0
      %p156 = por %p154, %p155
      %p157 = scmp.ne.s32.totalorder %s146, %s149
      %p158 = scmp.eq.s32.totalorder %s19, 1
      %p159 = por %p157, %p158
      %p160 = scmp.ne.s32.totalorder %s149, %s150
      %p161 = scmp.eq.s32.totalorder %s19, 0
      %p162 = por %p160, %p161
      %p163 = scmp.ne.s32.totalorder %s149, %s150
      %p164 = scmp.eq.s32.totalorder %s20, 1
      %p165 = por %p163, %p164
      %p167 = scmp.ne.s32.totalorder %s150, %s166
      %p168 = scmp.eq.s32.totalorder %s20, 0
      %p169 = por %p167, %p168
      %p170 = scmp.le.s32.totalorder 1, %s14
      %p171 = scmp.lt.s32.totalorder %s14, 3
      %p172 = pnand %p170, %p171
      %p173 = pneg %p172
      // Predicated region
      $region9: #{mha_forward.8} parent=5 // pred_check
        _
      $region10: #{mha_forward.8} parent=5 // pred_check_branch
        %175 = sbr.rel (%p172) target = $region12
      $region11: #{mha_forward.8} parent=5 // pred_region
        %s176 = ssub.s32 %s14, 1
      $region12: #{mha_forward.8} parent=5 // pred_fallthru
        _
      %p177 = scmp.lt.s32.totalorder %s14, 2
      // Predicated region
      $region13: #{mha_forward.8} parent=5 // pred_check
        %p178 = pneg %p177
      $region14: #{mha_forward.8} parent=5 // pred_check_branch
        %180 = sbr.rel (%p178) target = $region16
      $region15: #{mha_forward.8} parent=5 // pred_region
        // Predicated region
        $region17: #{mha_forward.8} parent=15 // pred_check
          %p181 = pneg %p48
        $region18: #{mha_forward.8} parent=15 // pred_check_branch
          %183 = sbr.rel (%p181) target = $region20
        $region19: #{mha_forward.8} parent=15 // pred_region
          %p184 = scmp.lt.s32.totalorder %s21, 1
          %s185 = scalar_select %p184, %s21, 1
          %p186 = scmp.lt.s32.totalorder %s22, 0
          %s187 = scalar_select %p186, %s22, 0
          %s188 = sadd.s32 %s187, %s185
          %s189 = smul.addr %s188, 8
          %s190 = scalar_lea.vmem %s0, %s189
        $region20: #{mha_forward.8} parent=15 // pred_fallthru
          _
        // Predicated region
        $region21: #{mha_forward.8} parent=15 // pred_check
          %p191 = pneg %p74
        $region22: #{mha_forward.8} parent=15 // pred_check_branch
          %193 = sbr.rel (%p191) target = $region24
        $region23: #{mha_forward.8} parent=15 // pred_region
          %p194 = scmp.lt.s32.totalorder %s21, 1
          %s195 = scalar_select %p194, %s21, 1
          %s196 = smul.addr %s195, 8
          %s197 = scalar_lea.vmem %s1, %s196
        $region24: #{mha_forward.8} parent=15 // pred_fallthru
          _
        // Predicated region
        $region25: #{mha_forward.8} parent=15 // pred_check
          %p198 = pneg %p100
        $region26: #{mha_forward.8} parent=15 // pred_check_branch
          %200 = sbr.rel (%p198) target = $region28
        $region27: #{mha_forward.8} parent=15 // pred_region
          %p201 = scmp.lt.s32.totalorder %s21, 1
          %s202 = scalar_select %p201, %s21, 1
          %s203 = smul.addr %s202, 8
          %s204 = scalar_lea.vmem %s2, %s203
        $region28: #{mha_forward.8} parent=15 // pred_fallthru
          _
      $region16: #{mha_forward.8} parent=5 // pred_fallthru
        _
      %p205 = scmp.le.s32.totalorder 1, %s14
      %p206 = scmp.lt.s32.totalorder %s14, 3
      %p207 = pnand %p205, %p206
      %p208 = pneg %p207
      // Predicated region
      $region29: #{mha_forward.8} parent=5 // pred_check
        _
      $region30: #{mha_forward.8} parent=5 // pred_check_branch
        %210 = sbr.rel (%p207) target = $region32
      $region31: #{mha_forward.8} parent=5 // pred_region
        %s211 = ssub.s32 %s14, 1
        %p212 = scmp.lt.s32.totalorder %s23, 1
        %s213 = scalar_select %p212, %s23, 1
        %p214 = scmp.lt.s32.totalorder %s24, 0
        %s215 = scalar_select %p214, %s24, 0
        %s216 = sadd.s32 %s215, %s213
        %s217 = smul.addr %s216, 8
        %s218 = scalar_lea.vmem %s0, %s217
        %p219 = pneg %p54
        %p220 = pneg %p51
        %p221 = scmp.lt.s32.totalorder %s23, 1
        %s222 = scalar_select %p221, %s23, 1
        %s223 = smul.addr %s222, 8
        %s224 = scalar_lea.vmem %s1, %s223
        %p225 = pneg %p80
        %p226 = pneg %p77
        %p227 = scmp.lt.s32.totalorder %s23, 1
        %s228 = scalar_select %p227, %s23, 1
        %s229 = smul.addr %s228, 8
        %s230 = scalar_lea.vmem %s2, %s229
        %p231 = pneg %p106
        %p232 = pneg %p103
        %p233 = pneg %p134
        %p234 = pneg %p131
        %p235 = scmp.lt.s32.totalorder %s23, 1
        %s236 = scalar_select %p235, %s23, 1
        %p237 = scmp.lt.s32.totalorder %s24, 0
        %s238 = scalar_select %p237, %s24, 0
        %s239 = sadd.s32 %s238, %s236
        %s240 = smul.addr %s239, 8
        %s241 = scalar_lea.vmem %s3, %s240
        %p242 = pneg %p162
        %p243 = pneg %p159
        %s244 = sand.u32 %s149, 1
        %s245 = scalar_lea.sflag [#allocation3], %s244
        %s246 = sand.u32 %s149, 1
        %s247 = smul.addr %s246, 8
        %s248 = scalar_lea.vmem [#allocation2], %s247
        %p249 = scmp.lt.s32.totalorder %s23, 1
        %s250 = scalar_select %p249, %s23, 1
        %p251 = scmp.lt.s32.totalorder %s24, 0
        %s252 = scalar_select %p251, %s24, 0
        %s253 = sadd.s32 %s252, %s250
        %s254 = smul.addr %s253, 8
        %s255 = scalar_lea.vmem %s0, %s254
        %p256 = scmp.lt.s32.totalorder %s23, 1
        %s257 = scalar_select %p256, %s23, 1
        %s258 = smul.addr %s257, 8
        %s259 = scalar_lea.vmem %s1, %s258
        %p260 = scmp.lt.s32.totalorder %s23, 1
        %s261 = scalar_select %p260, %s23, 1
        %s262 = smul.addr %s261, 8
        %s263 = scalar_lea.vmem %s2, %s262
        %p264 = scmp.lt.s32.totalorder %s23, 1
        %s265 = scalar_select %p264, %s23, 1
        %p266 = scmp.lt.s32.totalorder %s24, 0
        %s267 = scalar_select %p266, %s24, 0
        %s268 = sadd.s32 %s267, %s265
        %s269 = smul.addr %s268, 8
        %s270 = scalar_lea.vmem %s3, %s269
        %v272 = vld [vmem:[%s255] sm:$0xff]
        %v273 = vmul.f32 %v272, 0.35355338
        %v274 = vpack.c.bf16 %v273, %v273
        %v275 = vld [vmem:[%s259] sm:$0xff]
        %v276 = vpack.c.bf16 %v275, %v275
        %v277 = vld [vmem:[%s263] sm:$0xff]
        %v278 = vpack.c.bf16 %v277, %v277
        %vm279 = vcmask 64512
        %v281 = vsel %vm279, %v274, 0
        %v284 = vsel %vm279, %v276, 0
        %286 = vmatprep.subr.bf16.mxu0 0
        %287 = vmatpush1.bf16.xpose.msra.mxu0 %v284
        %288 = vmatprep.subr.bf16.mxu0 0
        %289 = vmatpush1.bf16.xpose.msra.mxu0 0
        %290 = vmatprep.subr.bf16.mxu0 0
        %291 = vmatpush1.bf16.xpose.msra.mxu0 0
        %292 = vmatprep.subr.bf16.mxu0 0
        %293 = vmatpush1.bf16.xpose.msra.mxu0 0
        %294 = vmatprep.subr.bf16.mxu0 0
        %295 = vmatpush1.bf16.xpose.msra.mxu0 0
        %296 = vmatprep.subr.bf16.mxu0 0
        %297 = vmatpush1.bf16.xpose.msra.mxu0 0
        %298 = vmatprep.subr.bf16.mxu0 0
        %299 = vmatpush1.bf16.xpose.msra.mxu0 0
        %300 = vmatprep.subr.bf16.mxu0 0
        %301 = vmatpush1.bf16.xpose.msra.mxu0 0
        %302 = vmatprep.subr.bf16.mxu0 0
        %303 = vmatpush1.bf16.xpose.msra.mxu0 0
        %304 = vmatprep.subr.bf16.mxu0 0
        %305 = vmatpush1.bf16.xpose.msra.mxu0 0
        %306 = vmatprep.subr.bf16.mxu0 0
        %307 = vmatpush1.bf16.xpose.msra.mxu0 0
        %308 = vmatprep.subr.bf16.mxu0 0
        %309 = vmatpush1.bf16.xpose.msra.mxu0 0
        %310 = vmatprep.subr.bf16.mxu0 0
        %311 = vmatpush1.bf16.xpose.msra.mxu0 0
        %312 = vmatprep.subr.bf16.mxu0 0
        %313 = vmatpush1.bf16.xpose.msra.mxu0 0
        %314 = vmatprep.subr.bf16.mxu0 0
        %315 = vmatpush1.bf16.xpose.msra.mxu0 0
        %316 = vmatprep.subr.bf16.mxu0 0
        %317 = vmatpush1.bf16.xpose.msra.mxu0 0
        %318 = vmatprep.mubr.bf16.mxu0 0
        %319 = vmatmul.mubr.bf16.gmra.mrb[0].mxu0 %v281
        %v320 = vpop.f32.mrb[0].mxu0
        %v321 = vadd.f32 0.0, %v320
        %v322 = vpop.f32.mrb[0].mxu0
        %v323 = vpop.f32.mrb[0].mxu0
        %v324 = vpop.f32.mrb[0].mxu0
        %325 = vdwg.mxu0
        %v326 = vsel %vm279, %v321, -inf
        %327 = vmax.xlane.f32.xlu0 %v326
        %v328 = vpop.xlane.xlu0 %327
        %v329 = vsub.f32 %v321, %v328
        %v330 = vmul.f32 %v329, 1.442695
        %v331 = vpow.pop %v330
        %v332 = vsel %vm279, %v331, 0.0
        %333 = vadd.xlane.f32.xlu0 %v332
        %v334 = vpop.xlane.xlu0 %333
        %v335 = vrcp.pop %v334
        %v336 = vmul.f32 %v331, %v335
        %v337 = vpack.c.bf16 %v336, %v336
        %v339 = vsel %vm279, %v337, 0
        %vm341 = vcmask 1043456
        %v343 = vsel %vm341, %v278, 0
        %345 = vmatprep.subr.bf16.mxu0 0
        %346 = vmatpush1.bf16.msra.mxu0 %v343
        %347 = vmatprep.subr.bf16.mxu0 0
        %348 = vmatpush1.bf16.msra.mxu0 0
        %349 = vmatprep.subr.bf16.mxu0 0
        %350 = vmatpush1.bf16.msra.mxu0 0
        %351 = vmatprep.subr.bf16.mxu0 0
        %352 = vmatpush1.bf16.msra.mxu0 0
        %353 = vmatprep.subr.bf16.mxu0 0
        %354 = vmatpush1.bf16.msra.mxu0 0
        %355 = vmatprep.subr.bf16.mxu0 0
        %356 = vmatpush1.bf16.msra.mxu0 0
        %357 = vmatprep.subr.bf16.mxu0 0
        %358 = vmatpush1.bf16.msra.mxu0 0
        %359 = vmatprep.subr.bf16.mxu0 0
        %360 = vmatpush1.bf16.msra.mxu0 0
        %361 = vmatprep.subr.bf16.mxu0 0
        %362 = vmatpush1.bf16.msra.mxu0 0
        %363 = vmatprep.subr.bf16.mxu0 0
        %364 = vmatpush1.bf16.msra.mxu0 0
        %365 = vmatprep.subr.bf16.mxu0 0
        %366 = vmatpush1.bf16.msra.mxu0 0
        %367 = vmatprep.subr.bf16.mxu0 0
        %368 = vmatpush1.bf16.msra.mxu0 0
        %369 = vmatprep.subr.bf16.mxu0 0
        %370 = vmatpush1.bf16.msra.mxu0 0
        %371 = vmatprep.subr.bf16.mxu0 0
        %372 = vmatpush1.bf16.msra.mxu0 0
        %373 = vmatprep.subr.bf16.mxu0 0
        %374 = vmatpush1.bf16.msra.mxu0 0
        %375 = vmatprep.subr.bf16.mxu0 0
        %376 = vmatpush1.bf16.msra.mxu0 0
        %377 = vmatprep.mubr.bf16.mxu0 0
        %378 = vmatmul.mubr.bf16.gmra.mrb[0].mxu0 %v339
        %v379 = vpop.f32.mrb[0].mxu0
        %v380 = vadd.f32 0.0, %v379
        %v381 = vpop.f32.mrb[0].mxu0
        %v382 = vpop.f32.mrb[0].mxu0
        %v383 = vpop.f32.mrb[0].mxu0
        %384 = vdwg.mxu0
        %386 = vrot.lane.b32.xlu0 %v274, 120
        %v387 = vpop.permute.xlu0 %386
        %389 = vrot.lane.b32.xlu0 %v276, 120
        %v390 = vpop.permute.xlu0 %389
        %v392 = vsel %vm279, %v387, 0
        %v395 = vsel %vm279, %v390, 0
        %397 = vmatprep.subr.bf16.mxu0 0
        %398 = vmatpush1.bf16.xpose.msra.mxu0 %v395
        %399 = vmatprep.subr.bf16.mxu0 0
        %400 = vmatpush1.bf16.xpose.msra.mxu0 0
        %401 = vmatprep.subr.bf16.mxu0 0
        %402 = vmatpush1.bf16.xpose.msra.mxu0 0
        %403 = vmatprep.subr.bf16.mxu0 0
        %404 = vmatpush1.bf16.xpose.msra.mxu0 0
        %405 = vmatprep.subr.bf16.mxu0 0
        %406 = vmatpush1.bf16.xpose.msra.mxu0 0
        %407 = vmatprep.subr.bf16.mxu0 0
        %408 = vmatpush1.bf16.xpose.msra.mxu0 0
        %409 = vmatprep.subr.bf16.mxu0 0
        %410 = vmatpush1.bf16.xpose.msra.mxu0 0
        %411 = vmatprep.subr.bf16.mxu0 0
        %412 = vmatpush1.bf16.xpose.msra.mxu0 0
        %413 = vmatprep.subr.bf16.mxu0 0
        %414 = vmatpush1.bf16.xpose.msra.mxu0 0
        %415 = vmatprep.subr.bf16.mxu0 0
        %416 = vmatpush1.bf16.xpose.msra.mxu0 0
        %417 = vmatprep.subr.bf16.mxu0 0
        %418 = vmatpush1.bf16.xpose.msra.mxu0 0
        %419 = vmatprep.subr.bf16.mxu0 0
        %420 = vmatpush1.bf16.xpose.msra.mxu0 0
        %421 = vmatprep.subr.bf16.mxu0 0
        %422 = vmatpush1.bf16.xpose.msra.mxu0 0
        %423 = vmatprep.subr.bf16.mxu0 0
        %424 = vmatpush1.bf16.xpose.msra.mxu0 0
        %425 = vmatprep.subr.bf16.mxu0 0
        %426 = vmatpush1.bf16.xpose.msra.mxu0 0
        %427 = vmatprep.subr.bf16.mxu0 0
        %428 = vmatpush1.bf16.xpose.msra.mxu0 0
        %429 = vmatprep.mubr.bf16.mxu0 0
        %430 = vmatmul.mubr.bf16.gmra.mrb[0].mxu0 %v392
        %v431 = vpop.f32.mrb[0].mxu0
        %v432 = vadd.f32 0.0, %v431
        %v433 = vpop.f32.mrb[0].mxu0
        %v434 = vpop.f32.mrb[0].mxu0
        %v435 = vpop.f32.mrb[0].mxu0
        %436 = vdwg.mxu0
        %v437 = vsel %vm279, %v432, -inf
        %438 = vmax.xlane.f32.xlu0 %v437
        %v439 = vpop.xlane.xlu0 %438
        %v440 = vsub.f32 %v432, %v439
        %v441 = vmul.f32 %v440, 1.442695
        %v442 = vpow.pop %v441
        %v443 = vsel %vm279, %v442, 0.0
        %444 = vadd.xlane.f32.xlu0 %v443
        %v445 = vpop.xlane.xlu0 %444
        %v446 = vrcp.pop %v445
        %v447 = vmul.f32 %v442, %v446
        %v448 = vadd.f32 %v336, %v447
        %v449 = vpack.c.bf16 %v447, %v447
        %451 = vrot.lane.b32.xlu0 %v278, 120
        %v452 = vpop.permute.xlu0 %451
        %v454 = vsel %vm279, %v449, 0
        %v457 = vsel %vm341, %v452, 0
        %459 = vmatprep.subr.bf16.mxu0 0
        %460 = vmatpush1.bf16.msra.mxu0 %v457
        %461 = vmatprep.subr.bf16.mxu0 0
        %462 = vmatpush1.bf16.msra.mxu0 0
        %463 = vmatprep.subr.bf16.mxu0 0
        %464 = vmatpush1.bf16.msra.mxu0 0
        %465 = vmatprep.subr.bf16.mxu0 0
        %466 = vmatpush1.bf16.msra.mxu0 0
        %467 = vmatprep.subr.bf16.mxu0 0
        %468 = vmatpush1.bf16.msra.mxu0 0
        %469 = vmatprep.subr.bf16.mxu0 0
        %470 = vmatpush1.bf16.msra.mxu0 0
        %471 = vmatprep.subr.bf16.mxu0 0
        %472 = vmatpush1.bf16.msra.mxu0 0
        %473 = vmatprep.subr.bf16.mxu0 0
        %474 = vmatpush1.bf16.msra.mxu0 0
        %475 = vmatprep.subr.bf16.mxu0 0
        %476 = vmatpush1.bf16.msra.mxu0 0
        %477 = vmatprep.subr.bf16.mxu0 0
        %478 = vmatpush1.bf16.msra.mxu0 0
        %479 = vmatprep.subr.bf16.mxu0 0
        %480 = vmatpush1.bf16.msra.mxu0 0
        %481 = vmatprep.subr.bf16.mxu0 0
        %482 = vmatpush1.bf16.msra.mxu0 0
        %483 = vmatprep.subr.bf16.mxu0 0
        %484 = vmatpush1.bf16.msra.mxu0 0
        %485 = vmatprep.subr.bf16.mxu0 0
        %486 = vmatpush1.bf16.msra.mxu0 0
        %487 = vmatprep.subr.bf16.mxu0 0
        %488 = vmatpush1.bf16.msra.mxu0 0
        %489 = vmatprep.subr.bf16.mxu0 0
        %490 = vmatpush1.bf16.msra.mxu0 0
        %491 = vmatprep.mubr.bf16.mxu0 0
        %492 = vmatmul.mubr.bf16.gmra.mrb[0].mxu0 %v454
        %v493 = vpop.f32.mrb[0].mxu0
        %v494 = vadd.f32 0.0, %v493
        %v495 = vpop.f32.mrb[0].mxu0
        %v496 = vpop.f32.mrb[0].mxu0
        %v497 = vpop.f32.mrb[0].mxu0
        %498 = vdwg.mxu0
        %499 = vrot.lane.b32.xlu0 %v274, 112
        %v500 = vpop.permute.xlu0 %499
        %501 = vrot.lane.b32.xlu0 %v276, 112
        %v502 = vpop.permute.xlu0 %501
        %v504 = vsel %vm279, %v500, 0
        %v507 = vsel %vm279, %v502, 0
        %509 = vmatprep.subr.bf16.mxu0 0
        %510 = vmatpush1.bf16.xpose.msra.mxu0 %v507
        %511 = vmatprep.subr.bf16.mxu0 0
        %512 = vmatpush1.bf16.xpose.msra.mxu0 0
        %513 = vmatprep.subr.bf16.mxu0 0
        %514 = vmatpush1.bf16.xpose.msra.mxu0 0
        %515 = vmatprep.subr.bf16.mxu0 0
        %516 = vmatpush1.bf16.xpose.msra.mxu0 0
        %517 = vmatprep.subr.bf16.mxu0 0
        %518 = vmatpush1.bf16.xpose.msra.mxu0 0
        %519 = vmatprep.subr.bf16.mxu0 0
        %520 = vmatpush1.bf16.xpose.msra.mxu0 0
        %521 = vmatprep.subr.bf16.mxu0 0
        %522 = vmatpush1.bf16.xpose.msra.mxu0 0
        %523 = vmatprep.subr.bf16.mxu0 0
        %524 = vmatpush1.bf16.xpose.msra.mxu0 0
        %525 = vmatprep.subr.bf16.mxu0 0
        %526 = vmatpush1.bf16.xpose.msra.mxu0 0
        %527 = vmatprep.subr.bf16.mxu0 0
        %528 = vmatpush1.bf16.xpose.msra.mxu0 0
        %529 = vmatprep.subr.bf16.mxu0 0
        %530 = vmatpush1.bf16.xpose.msra.mxu0 0
        %531 = vmatprep.subr.bf16.mxu0 0
        %532 = vmatpush1.bf16.xpose.msra.mxu0 0
        %533 = vmatprep.subr.bf16.mxu0 0
        %534 = vmatpush1.bf16.xpose.msra.mxu0 0
        %535 = vmatprep.subr.bf16.mxu0 0
        %536 = vmatpush1.bf16.xpose.msra.mxu0 0
        %537 = vmatprep.subr.bf16.mxu0 0
        %538 = vmatpush1.bf16.xpose.msra.mxu0 0
        %539 = vmatprep.subr.bf16.mxu0 0
        %540 = vmatpush1.bf16.xpose.msra.mxu0 0
        %541 = vmatprep.mubr.bf16.mxu0 0
        %542 = vmatmul.mubr.bf16.gmra.mrb[0].mxu0 %v504
        %v543 = vpop.f32.mrb[0].mxu0
        %v544 = vadd.f32 0.0, %v543
        %v545 = vpop.f32.mrb[0].mxu0
        %v546 = vpop.f32.mrb[0].mxu0
        %v547 = vpop.f32.mrb[0].mxu0
        %548 = vdwg.mxu0
        %v549 = vsel %vm279, %v544, -inf
        %550 = vmax.xlane.f32.xlu0 %v549
        %v551 = vpop.xlane.xlu0 %550
        %v552 = vsub.f32 %v544, %v551
        %v553 = vmul.f32 %v552, 1.442695
        %v554 = vpow.pop %v553
        %v555 = vsel %vm279, %v554, 0.0
        %556 = vadd.xlane.f32.xlu0 %v555
        %v557 = vpop.xlane.xlu0 %556
        %v558 = vrcp.pop %v557
        %v559 = vmul.f32 %v554, %v558
        %v560 = vadd.f32 %v448, %v559
        %v561 = vpack.c.bf16 %v559, %v559
        %562 = vrot.lane.b32.xlu0 %v278, 112
        %v563 = vpop.permute.xlu0 %562
        %v565 = vsel %vm279, %v561, 0
        %v568 = vsel %vm341, %v563, 0
        %570 = vmatprep.subr.bf16.mxu0 0
        %571 = vmatpush1.bf16.msra.mxu0 %v568
        %572 = vmatprep.subr.bf16.mxu0 0
        %573 = vmatpush1.bf16.msra.mxu0 0
        %574 = vmatprep.subr.bf16.mxu0 0
        %575 = vmatpush1.bf16.msra.mxu0 0
        %576 = vmatprep.subr.bf16.mxu0 0
        %577 = vmatpush1.bf16.msra.mxu0 0
        %578 = vmatprep.subr.bf16.mxu0 0
        %579 = vmatpush1.bf16.msra.mxu0 0
        %580 = vmatprep.subr.bf16.mxu0 0
        %581 = vmatpush1.bf16.msra.mxu0 0
        %582 = vmatprep.subr.bf16.mxu0 0
        %583 = vmatpush1.bf16.msra.mxu0 0
        %584 = vmatprep.subr.bf16.mxu0 0
        %585 = vmatpush1.bf16.msra.mxu0 0
        %586 = vmatprep.subr.bf16.mxu0 0
        %587 = vmatpush1.bf16.msra.mxu0 0
        %588 = vmatprep.subr.bf16.mxu0 0
        %589 = vmatpush1.bf16.msra.mxu0 0
        %590 = vmatprep.subr.bf16.mxu0 0
        %591 = vmatpush1.bf16.msra.mxu0 0
        %592 = vmatprep.subr.bf16.mxu0 0
        %593 = vmatpush1.bf16.msra.mxu0 0
        %594 = vmatprep.subr.bf16.mxu0 0
        %595 = vmatpush1.bf16.msra.mxu0 0
        %596 = vmatprep.subr.bf16.mxu0 0
        %597 = vmatpush1.bf16.msra.mxu0 0
        %598 = vmatprep.subr.bf16.mxu0 0
        %599 = vmatpush1.bf16.msra.mxu0 0
        %600 = vmatprep.subr.bf16.mxu0 0
        %601 = vmatpush1.bf16.msra.mxu0 0
        %602 = vmatprep.mubr.bf16.mxu0 0
        %603 = vmatmul.mubr.bf16.gmra.mrb[0].mxu0 %v565
        %v604 = vpop.f32.mrb[0].mxu0
        %v605 = vadd.f32 0.0, %v604
        %v606 = vpop.f32.mrb[0].mxu0
        %v607 = vpop.f32.mrb[0].mxu0
        %v608 = vpop.f32.mrb[0].mxu0
        %609 = vdwg.mxu0
        %610 = vrot.lane.b32.xlu0 %v274, 104
        %v611 = vpop.permute.xlu0 %610
        %612 = vrot.lane.b32.xlu0 %v276, 104
        %v613 = vpop.permute.xlu0 %612
        %v615 = vsel %vm279, %v611, 0
        %v618 = vsel %vm279, %v613, 0
        %620 = vmatprep.subr.bf16.mxu0 0
        %621 = vmatpush1.bf16.xpose.msra.mxu0 %v618
        %622 = vmatprep.subr.bf16.mxu0 0
        %623 = vmatpush1.bf16.xpose.msra.mxu0 0
        %624 = vmatprep.subr.bf16.mxu0 0
        %625 = vmatpush1.bf16.xpose.msra.mxu0 0
        %626 = vmatprep.subr.bf16.mxu0 0
        %627 = vmatpush1.bf16.xpose.msra.mxu0 0
        %628 = vmatprep.subr.bf16.mxu0 0
        %629 = vmatpush1.bf16.xpose.msra.mxu0 0
        %630 = vmatprep.subr.bf16.mxu0 0
        %631 = vmatpush1.bf16.xpose.msra.mxu0 0
        %632 = vmatprep.subr.bf16.mxu0 0
        %633 = vmatpush1.bf16.xpose.msra.mxu0 0
        %634 = vmatprep.subr.bf16.mxu0 0
        %635 = vmatpush1.bf16.xpose.msra.mxu0 0
        %636 = vmatprep.subr.bf16.mxu0 0
        %637 = vmatpush1.bf16.xpose.msra.mxu0 0
        %638 = vmatprep.subr.bf16.mxu0 0
        %639 = vmatpush1.bf16.xpose.msra.mxu0 0
        %640 = vmatprep.subr.bf16.mxu0 0
        %641 = vmatpush1.bf16.xpose.msra.mxu0 0
        %642 = vmatprep.subr.bf16.mxu0 0
        %643 = vmatpush1.bf16.xpose.msra.mxu0 0
        %644 = vmatprep.subr.bf16.mxu0 0
        %645 = vmatpush1.bf16.xpose.msra.mxu0 0
        %646 = vmatprep.subr.bf16.mxu0 0
        %647 = vmatpush1.bf16.xpose.msra.mxu0 0
        %648 = vmatprep.subr.bf16.mxu0 0
        %649 = vmatpush1.bf16.xpose.msra.mxu0 0
        %650 = vmatprep.subr.bf16.mxu0 0
        %651 = vmatpush1.bf16.xpose.msra.mxu0 0
        %652 = vmatprep.mubr.bf16.mxu0 0
        %653 = vmatmul.mubr.bf16.gmra.mrb[0].mxu0 %v615
        %v654 = vpop.f32.mrb[0].mxu0
        %v655 = vadd.f32 0.0, %v654
        %v656 = vpop.f32.mrb[0].mxu0
        %v657 = vpop.f32.mrb[0].mxu0
        %v658 = vpop.f32.mrb[0].mxu0
        %659 = vdwg.mxu0
        %v660 = vsel %vm279, %v655, -inf
        %661 = vmax.xlane.f32.xlu0 %v660
        %v662 = vpop.xlane.xlu0 %661
        %v663 = vsub.f32 %v655, %v662
        %v664 = vmul.f32 %v663, 1.442695
        %v665 = vpow.pop %v664
        %v666 = vsel %vm279, %v665, 0.0
        %667 = vadd.xlane.f32.xlu0 %v666
        %v668 = vpop.xlane.xlu0 %667
        %v669 = vrcp.pop %v668
        %v670 = vmul.f32 %v665, %v669
        %v671 = vadd.f32 %v560, %v670
        %v672 = vpack.c.bf16 %v670, %v670
        %673 = vrot.lane.b32.xlu0 %v278, 104
        %v674 = vpop.permute.xlu0 %673
        %v676 = vsel %vm279, %v672, 0
        %v679 = vsel %vm341, %v674, 0
        %681 = vmatprep.subr.bf16.mxu0 0
        %682 = vmatpush1.bf16.msra.mxu0 %v679
        %683 = vmatprep.subr.bf16.mxu0 0
        %684 = vmatpush1.bf16.msra.mxu0 0
        %685 = vmatprep.subr.bf16.mxu0 0
        %686 = vmatpush1.bf16.msra.mxu0 0
        %687 = vmatprep.subr.bf16.mxu0 0
        %688 = vmatpush1.bf16.msra.mxu0 0
        %689 = vmatprep.subr.bf16.mxu0 0
        %690 = vmatpush1.bf16.msra.mxu0 0
        %691 = vmatprep.subr.bf16.mxu0 0
        %692 = vmatpush1.bf16.msra.mxu0 0
        %693 = vmatprep.subr.bf16.mxu0 0
        %694 = vmatpush1.bf16.msra.mxu0 0
        %695 = vmatprep.subr.bf16.mxu0 0
        %696 = vmatpush1.bf16.msra.mxu0 0
        %697 = vmatprep.subr.bf16.mxu0 0
        %698 = vmatpush1.bf16.msra.mxu0 0
        %699 = vmatprep.subr.bf16.mxu0 0
        %700 = vmatpush1.bf16.msra.mxu0 0
        %701 = vmatprep.subr.bf16.mxu0 0
        %702 = vmatpush1.bf16.msra.mxu0 0
        %703 = vmatprep.subr.bf16.mxu0 0
        %704 = vmatpush1.bf16.msra.mxu0 0
        %705 = vmatprep.subr.bf16.mxu0 0
        %706 = vmatpush1.bf16.msra.mxu0 0
        %707 = vmatprep.subr.bf16.mxu0 0
        %708 = vmatpush1.bf16.msra.mxu0 0
        %709 = vmatprep.subr.bf16.mxu0 0
        %710 = vmatpush1.bf16.msra.mxu0 0
        %711 = vmatprep.subr.bf16.mxu0 0
        %712 = vmatpush1.bf16.msra.mxu0 0
        %713 = vmatprep.mubr.bf16.mxu0 0
        %714 = vmatmul.mubr.bf16.gmra.mrb[0].mxu0 %v676
        %v715 = vpop.f32.mrb[0].mxu0
        %v716 = vadd.f32 0.0, %v715
        %v717 = vpop.f32.mrb[0].mxu0
        %v718 = vpop.f32.mrb[0].mxu0
        %v719 = vpop.f32.mrb[0].mxu0
        %720 = vdwg.mxu0
        %722 = vrot.lane.b32.xlu0 %v494, 8
        %v723 = vpop.permute.xlu0 %722
        %726 = vrot.lane.b32.xlu0 %v605, 16
        %v727 = vpop.permute.xlu0 %726
        %730 = vrot.lane.b32.xlu0 %v716, 24
        %v731 = vpop.permute.xlu0 %730
        %v733 = vsel %vm279, %v380, %v723
        %vm734 = vcmask 130048
        %v735 = vsel %vm734, %v733, %v727
        %vm736 = vcmask 195584
        %v737 = vsel %vm736, %v735, %v731
        %vm738 = vcmask 261120
        %739 = vst.msk [vmem:[%s270] sm:$0xff] %vm738, %v737
        %740 = vst.msk [vmem:[%s248] sm:$0xff] %vm279, %v671
        %p741 = scmp.lt.s32.totalorder %s23, 1
        %s742 = scalar_select %p741, %s23, 1
        %p743 = scmp.lt.s32.totalorder %s24, 0
        %s744 = scalar_select %p743, %s24, 0
        %s745 = sadd.s32 %s744, %s742
        %s746 = smul.addr %s745, 8
        %s747 = scalar_lea.vmem %s3, %s746
        %s748 = sand.u32 %s149, 1
        %s749 = scalar_lea.sflag [#allocation3], %s748
        %s750 = sand.u32 %s149, 1
        %s751 = smul.addr %s750, 8
        %s752 = scalar_lea.vmem [#allocation2], %s751
        // Predicated region
        $region33: #{mha_forward.8} parent=31 // pred_check
          %p753 = pneg %p131
        $region34: #{mha_forward.8} parent=31 // pred_check_branch
          %755 = sbr.rel (%p753) target = $region36
        $region35: #{mha_forward.8} parent=31 // pred_region
          _
        $region36: #{mha_forward.8} parent=31 // pred_fallthru
          _
        // Predicated region
        $region37: #{mha_forward.8} parent=31 // pred_check
          %p756 = pneg %p159
        $region38: #{mha_forward.8} parent=31 // pred_check_branch
          %758 = sbr.rel (%p756) target = $region40
        $region39: #{mha_forward.8} parent=31 // pred_region
          %s760 = ssub.s32 128, 128
          %761 = vsyncadd %s749, %s760
          %s762 = sadd.s32 %s24, %s23
          %s763 = smul.addr %s762, 128
          %s764 = scalar_lea.hbm %s4, %s763
          %s766 = sshll.u32 %s752, 4
          %s767 = int_to_ptr.vmem [resolvable:$true] %s766
          %769 = dma.vmem_to_hbm [thread:$0]  %s767, 128, %s764, %s749
        $region40: #{mha_forward.8} parent=31 // pred_fallthru
          _
      $region32: #{mha_forward.8} parent=5 // pred_fallthru
        _
      %p770 = scmp.le.s32.totalorder 2, %s14
      // Predicated region
      $region41: #{mha_forward.8} parent=5 // pred_check
        %p771 = pneg %p770
      $region42: #{mha_forward.8} parent=5 // pred_check_branch
        %773 = sbr.rel (%p771) target = $region44
      $region43: #{mha_forward.8} parent=5 // pred_region
        %s774 = ssub.s32 %s14, 2
        // Predicated region
        $region45: #{mha_forward.8} parent=43 // pred_check
          %p775 = pneg %p137
        $region46: #{mha_forward.8} parent=43 // pred_check_branch
          %777 = sbr.rel (%p775) target = $region48
        $region47: #{mha_forward.8} parent=43 // pred_region
          %p778 = scmp.lt.s32.totalorder %s25, 1
          %s779 = scalar_select %p778, %s25, 1
          %p780 = scmp.lt.s32.totalorder %s26, 0
          %s781 = scalar_select %p780, %s26, 0
          %s782 = sadd.s32 %s781, %s779
          %s783 = smul.addr %s782, 8
          %s784 = scalar_lea.vmem %s3, %s783
        $region48: #{mha_forward.8} parent=43 // pred_fallthru
          _
        // Predicated region
        $region49: #{mha_forward.8} parent=43 // pred_check
          %p785 = pneg %p165
        $region50: #{mha_forward.8} parent=43 // pred_check_branch
          %787 = sbr.rel (%p785) target = $region52
        $region51: #{mha_forward.8} parent=43 // pred_region
          %s788 = sand.u32 %s150, 1
          %s789 = scalar_lea.sflag [#allocation3], %s788
          %s790 = sand.u32 %s150, 1
          %s791 = smul.addr %s790, 8
          %s792 = scalar_lea.vmem [#allocation2], %s791
          %793 = dma.done %s789, 128
        $region52: #{mha_forward.8} parent=43 // pred_fallthru
          _
      $region44: #{mha_forward.8} parent=5 // pred_fallthru
        _
    $region6: #{mha_forward.8} parent=1 // loop_footer
      %s18 = sadd.s32 1, %s14
    $region7: #{mha_forward.8} parent=1 // loop_footer_branch
      %13 = sbr.rel target = $region3
    $region8: #{mha_forward.8} parent=1 // loop_exit
      _
    %794 = vsyncpa [#allocation3], 1
    %s795 = scalar_lea.sflag [#allocation3], 1
    %796 = vsyncpa %s795, 1

</llo_original>
